<compile_context>
chip_gen: v7x
topology: tpu7x:2x2x1
jax: 0.10.0
libtpu: 0.0.40
codegen_flags: <defaults>
</compile_context>

<pallas_src>
import math
from functools import partial

import jax
import jax.numpy as jnp
from jax.experimental import pallas as pl
from jax.experimental.pallas import tpu as pltpu

# ----------------------- config (small, Mistral-like) -----------------------
HIDDEN = 32
NUM_HEADS = 4
NUM_KV_HEADS = 2
HEAD_DIM = HIDDEN // NUM_HEADS          # 8
NUM_KV_GROUPS = NUM_HEADS // NUM_KV_HEADS
ROPE_THETA = 10000.0
BSZ = 2
Q_LEN = 8
# kv_bit >= 16 in this synthetic config -> no pseudo-quantization branch.
# attention_dropout = 0.0 (eval mode) -> dropout is identity.


def _attn_kernel(h_ref, wf_ref, wo3_ref, cos_ref, sin_ref, mask_ref, out_ref,
                 *, num_heads, num_kv_heads, head_dim, bsz, q_len,
                 head_split, attn_dtype):
    """Fused qkv projection + RoPE + GQA attention + o_proj for the whole batch."""
    groups = num_heads // num_kv_heads
    rows = bsz * q_len
    hd = num_heads * head_dim
    kvd = num_kv_heads * head_dim
    main_w = hd + 2 * kvd                    # width of the [q | k | v] section

    # ---- fused q/k/v (+rotate-half companions) projection: one MXU pass ----
    # hidden and w_fused are pre-cast to bf16 in the wrapper; 1/sqrt(head_dim)
    # is already folded into the q columns.
    p = jnp.dot(h_ref[...], wf_ref[...],
                preferred_element_type=jnp.float32)              # (rows, 2*main_w)

    # ---- RoPE for q and k simultaneously (v passes through: cos=1, sin=0) ----
    # p[:, :main_w] = [q | k | v];  p[:, main_w:] = [rot_half(q) | rot_half(k) | 0]
    e = p[:, :main_w] * cos_ref[...] + p[:, main_w:] * sin_ref[...]  # f32
    e = e.astype(attn_dtype)

    # ---- head split: one reshape + einshape per tensor (no per-head slices) ----
    if head_split == "einshape":
        q_h = pltpu.einshape("nhd->hnd",
                             e[:, :hd].reshape(rows, num_heads, head_dim))
        k_h = pltpu.einshape("njd->jnd",
                             e[:, hd:hd + kvd].reshape(rows, num_kv_heads, head_dim))
        v_h = pltpu.einshape("njd->jnd",
                             e[:, hd + kvd:].reshape(rows, num_kv_heads, head_dim))
    else:
        # Lowering-proven fallback (previous revision): per-head lane slices + stack.
        q_h = jnp.stack(
            [e[:, h * head_dim:(h + 1) * head_dim] for h in range(num_heads)], axis=0)
        k_h = jnp.stack(
            [e[:, hd + j * head_dim: hd + (j + 1) * head_dim]
             for j in range(num_kv_heads)], axis=0)
        v_h = jnp.stack(
            [e[:, hd + kvd + j * head_dim: hd + kvd + (j + 1) * head_dim]
             for j in range(num_kv_heads)], axis=0)

    # GQA fold: (H, rows, D) -> (KV, groups*rows, D); row order (g, b, t).
    # K/V are never repeated; the batch fold is handled by the block-diagonal
    # additive mask (cross-batch key columns get -1e30).
    qg = q_h.reshape(num_kv_heads, groups * rows, head_dim)

    # ---- attention scores, batched over kv heads (scale already folded in) ----
    scores = jnp.einsum('jnd,jkd->jnk', qg, k_h,
                        preferred_element_type=jnp.float32)      # (KV, G*rows, rows)
    scores = scores + mask_ref[...][None, :, :]

    # ---- single softmax pass for all heads; reciprocal on the EUP slot ----
    m = jnp.max(scores, axis=-1, keepdims=True)
    unnorm = jnp.exp(scores - m)
    denom = jnp.sum(unnorm, axis=-1, keepdims=True)
    probs = unnorm * pl.reciprocal(denom, approx=True)

    # ---- attention * V, batched over kv heads ----
    ctx = jnp.einsum('jnk,jkd->jnd', probs.astype(attn_dtype), v_h,
                     preferred_element_type=jnp.float32)         # (KV, G*rows, D)
    ctx = ctx.reshape(num_heads, rows, head_dim)                 # (H, rows, D)

    # ---- output projection folded per head, then summed over heads ----
    per_head = jnp.einsum('hnd,hdo->hno',
                          ctx.astype(wo3_ref.dtype), wo3_ref[...],
                          preferred_element_type=jnp.float32)    # (H, rows, hidden)
    out_ref[...] = jnp.sum(per_head, axis=0)                     # (rows, hidden)


def mistral_attention_pallas(hidden_states, wq, wk, wv, wo, cos, sin, mask,
                             *, num_heads=NUM_HEADS, num_kv_heads=NUM_KV_HEADS,
                             head_split="einshape",
                             attn_matmul_dtype=jnp.bfloat16):
    """hidden_states: (bsz, q_len, hidden) f32.
    wq/wk/wv/wo are stored (in_features, out_features), cos/sin are (q_len, head_dim),
    mask is an additive (q_len, q_len) causal mask shared across the batch.
    attn_matmul_dtype: bf16 on v6e/v7x; set jnp.float32 on v5e (no VPU bf16)."""
    bsz, q_len, hidden = hidden_states.shape
    head_dim = wq.shape[1] // num_heads
    groups = num_heads // num_kv_heads
    rows = bsz * q_len
    hd = num_heads * head_dim
    kvd = num_kv_heads * head_dim
    main_w = hd + 2 * kvd
    f32 = jnp.float32
    inv_scale = 1.0 / math.sqrt(head_dim)

    def rot_cols(w, n_heads):
        # Column-permuted/negated weights so that x @ rot_cols(w) == rotate_half(x @ w).
        w3 = w.reshape(hidden, n_heads, head_dim)
        return jnp.concatenate(
            [-w3[..., head_dim // 2:], w3[..., :head_dim // 2]],
            axis=-1).reshape(hidden, n_heads * head_dim)

    # Layout: [ Wq/sqrt(D) | Wk | Wv | rot(Wq)/sqrt(D) | rot(Wk) | 0 ]
    #   -> (hidden, 2*main_w) = (32, 128), pre-cast to bf16 (halves weight DMA).
    zero_pad = jnp.zeros((hidden, kvd), wq.dtype)
    w_fused = jnp.concatenate(
        [wq * inv_scale, wk, wv,
         rot_cols(wq, num_heads) * inv_scale, rot_cols(wk, num_kv_heads), zero_pad],
        axis=1).astype(jnp.bfloat16)
    wo3 = wo.reshape(num_heads, head_dim, hidden).astype(jnp.bfloat16)

    # cos/sin tiled per row (b, t) and per lane section ([q | k | v(=identity)]).
    cos_rows = jnp.tile(cos, (bsz, 1))                            # (rows, head_dim)
    sin_rows = jnp.tile(sin, (bsz, 1))
    cos_t = jnp.concatenate([jnp.tile(cos_rows, (1, num_heads)),
                             jnp.tile(cos_rows, (1, num_kv_heads)),
                             jnp.ones((rows, kvd), f32)], axis=1)  # (rows, main_w)
    sin_t = jnp.concatenate([jnp.tile(sin_rows, (1, num_heads)),
                             jnp.tile(sin_rows, (1, num_kv_heads)),
                             jnp.zeros((rows, kvd), f32)], axis=1)

    # Block-diagonal-over-batch additive mask: query rows ordered (g, b, t),
    # key columns ordered (b', t'); same-batch blocks carry the shared causal
    # mask, cross-batch blocks get -1e30 (so the batch fold needs no transpose).
    row_b = jnp.repeat(jnp.arange(bsz), q_len)
    same_batch = row_b[:, None] == row_b[None, :]                 # (rows, rows)
    mask_bt = jnp.where(same_batch, jnp.tile(mask, (bsz, bsz)),
                        jnp.full((rows, rows), -1e30, f32)).astype(f32)
    mask_t = jnp.tile(mask_bt, (groups, 1))                       # (groups*rows, rows)

    # Batch folded into the row axis; pre-cast activations to bf16.
    h2d = hidden_states.reshape(rows, hidden).astype(jnp.bfloat16)

    kernel = partial(_attn_kernel, num_heads=num_heads, num_kv_heads=num_kv_heads,
                     head_dim=head_dim, bsz=bsz, q_len=q_len,
                     head_split=head_split, attn_dtype=attn_matmul_dtype)

    out2d = pl.pallas_call(
        kernel,
        out_shape=jax.ShapeDtypeStruct((rows, hidden), jnp.float32),
        grid_spec=pltpu.PrefetchScalarGridSpec(
            num_scalar_prefetch=0,
            # Single grid step: total work is far below per-step pipeline
            # overhead, so one fat step wins on v5e/v6e/v7x alike.
            grid=(1,),
            in_specs=[
                pl.BlockSpec((rows, hidden), lambda i: (0, 0)),
                pl.BlockSpec(w_fused.shape, lambda i: (0, 0)),
                pl.BlockSpec(wo3.shape, lambda i: (0, 0, 0)),
                pl.BlockSpec(cos_t.shape, lambda i: (0, 0)),
                pl.BlockSpec(sin_t.shape, lambda i: (0, 0)),
                pl.BlockSpec(mask_t.shape, lambda i: (0, 0)),
            ],
            out_specs=pl.BlockSpec((rows, hidden), lambda i: (0, 0)),
        ),
        compiler_params=pltpu.CompilerParams(
            dimension_semantics=("arbitrary",),
        ),
    )(h2d, w_fused, wo3, cos_t, sin_t, mask_t)
    return out2d.reshape(bsz, q_len, hidden)


# ------------------------- plain-JAX (f32) reference -------------------------
def _reference(hidden_states, wq, wk, wv, wo, cos, sin, mask):
    bsz, q_len, _ = hidden_states.shape
    q = hidden_states @ wq
    k = hidden_states @ wk
    v = hidden_states @ wv
    q = q.reshape(bsz, q_len, NUM_HEADS, HEAD_DIM).transpose(0, 2, 1, 3)
    k = k.reshape(bsz, q_len, NUM_KV_HEADS, HEAD_DIM).transpose(0, 2, 1, 3)
    v = v.reshape(bsz, q_len, NUM_KV_HEADS, HEAD_DIM).transpose(0, 2, 1, 3)

    def rot(x):
        x1, x2 = x[..., :HEAD_DIM // 2], x[..., HEAD_DIM // 2:]
        return jnp.concatenate([-x2, x1], axis=-1)

    c = cos[None, None]
    s = sin[None, None]
    q = q * c + rot(q) * s
    k = k * c + rot(k) * s
    k = jnp.repeat(k, NUM_KV_GROUPS, axis=1)
    v = jnp.repeat(v, NUM_KV_GROUPS, axis=1)
    scores = jnp.einsum("bhqd,bhkd->bhqk", q, k) / math.sqrt(HEAD_DIM)
    scores = scores + mask[None, None]
    probs = jax.nn.softmax(scores, axis=-1)
    out = jnp.einsum("bhqk,bhkd->bhqd", probs, v)
    out = out.transpose(0, 2, 1, 3).reshape(bsz, q_len, HIDDEN)
    return out @ wo


if __name__ == "__main__":
    key = jax.random.PRNGKey(0)
    k_h, k_q, k_k, k_v, k_o = jax.random.split(key, 5)

    hidden_states = jax.random.normal(k_h, (BSZ, Q_LEN, HIDDEN), dtype=jnp.float32)

    # Deterministic nn.Linear-like init, stored as (in_features, out_features).
    def init_linear(k, fan_in, fan_out):
        bound = 1.0 / math.sqrt(fan_in)
        return jax.random.uniform(k, (fan_in, fan_out), jnp.float32, -bound, bound)

    wq = init_linear(k_q, HIDDEN, NUM_HEADS * HEAD_DIM)
    wk = init_linear(k_k, HIDDEN, NUM_KV_HEADS * HEAD_DIM)
    wv = init_linear(k_v, HIDDEN, NUM_KV_HEADS * HEAD_DIM)
    wo = init_linear(k_o, NUM_HEADS * HEAD_DIM, HIDDEN)

    # MistralRotaryEmbedding tables for positions 0..q_len-1.
    inv_freq = 1.0 / (ROPE_THETA ** (jnp.arange(0, HEAD_DIM, 2, dtype=jnp.float32) / HEAD_DIM))
    positions = jnp.arange(Q_LEN, dtype=jnp.float32)
    freqs = positions[:, None] * inv_freq[None, :]
    emb = jnp.concatenate([freqs, freqs], axis=-1)
    cos = jnp.cos(emb)
    sin = jnp.sin(emb)

    # Additive causal mask shared across the batch; large-but-safe negative so
    # masked scores cannot round to -inf.
    mask = jnp.triu(jnp.full((Q_LEN, Q_LEN), -1e30, dtype=jnp.float32), k=1)

    def _run(head_split):
        o = mistral_attention_pallas(hidden_states, wq, wk, wv, wo, cos, sin, mask,
                                     head_split=head_split)
        return jax.block_until_ready(o)

    try:
        out = _run("einshape")
    except Exception:
        # TODO(synk): fallback for Mosaic builds that reject the small-shape
        # reshape + einshape head split; identical math via lane slices + stack.
        out = _run("stack")

    ref = _reference(hidden_states, wq, wk, wv, wo, cos, sin, mask)
    # Kernel uses bf16 MXU operands (f32 accumulation) + an approximate EUP
    # reciprocal in the softmax, so compare to the pure-f32 reference with a
    # mixed-precision tolerance.
    assert jnp.allclose(out, ref, atol=5e-2, rtol=5e-2), "mismatch vs reference"

    print("KERNEL_OK")
</pallas_src>

<mosaic_0001>
module attributes {stable_mosaic.version = 11 : i64} {
  func.func @_attn_kernel(%arg0: i32, %arg1: memref<16x32xbf16, #tpu.memory_space<vmem>>, %arg2: memref<32x128xbf16, #tpu.memory_space<vmem>>, %arg3: memref<4x8x32xbf16, #tpu.memory_space<vmem>>, %arg4: memref<16x64xf32, #tpu.memory_space<vmem>>, %arg5: memref<16x64xf32, #tpu.memory_space<vmem>>, %arg6: memref<32x16xf32, #tpu.memory_space<vmem>>, %arg7: memref<16x32xf32, #tpu.memory_space<vmem>>) attributes {dimension_semantics = [#tpu.dimension_semantics<arbitrary>], iteration_bounds = array<i64: 1>, scalar_prefetch = 0 : i64, scratch_operands = 0 : i64, tpu.core_type = #tpu.core_type<tc>, window_params = [{pipeline_mode = #tpu.pipeline_mode<synchronous>, transform_indices = @transform_0, window_bounds = array<i64: 16, 32>}, {pipeline_mode = #tpu.pipeline_mode<synchronous>, transform_indices = @transform_1, window_bounds = array<i64: 32, 128>}, {pipeline_mode = #tpu.pipeline_mode<synchronous>, transform_indices = @transform_2, window_bounds = array<i64: 4, 8, 32>}, {pipeline_mode = #tpu.pipeline_mode<synchronous>, transform_indices = @transform_3, window_bounds = array<i64: 16, 64>}, {pipeline_mode = #tpu.pipeline_mode<synchronous>, transform_indices = @transform_4, window_bounds = array<i64: 16, 64>}, {pipeline_mode = #tpu.pipeline_mode<synchronous>, transform_indices = @transform_5, window_bounds = array<i64: 32, 16>}, {pipeline_mode = #tpu.pipeline_mode<synchronous>, transform_indices = @transform_6, window_bounds = array<i64: 16, 32>}]} {
    %c0 = arith.constant 0 : index
    %c0_0 = arith.constant 0 : index
    %0 = vector.load %arg1[%c0, %c0_0] : memref<16x32xbf16, #tpu.memory_space<vmem>>, vector<16x32xbf16>
    %c0_1 = arith.constant 0 : index
    %c0_2 = arith.constant 0 : index
    %1 = vector.load %arg2[%c0_1, %c0_2] : memref<32x128xbf16, #tpu.memory_space<vmem>>, vector<32x128xbf16>
    %cst = arith.constant dense<0.000000e+00> : vector<16x128xf32>
    %2 = tpu.matmul %0, %1, %cst {dimension_numbers = #tpu.dot_dimension_numbers<[1], [0], [0], [1], [0, 0, 1, 1], [], []>} : vector<16x32xbf16>, vector<32x128xbf16>, vector<16x128xf32> -> vector<16x128xf32>
    %3 = vector.extract_strided_slice %2 {offsets = [0, 0], sizes = [16, 64], strides = [1, 1]} : vector<16x128xf32> to vector<16x64xf32>
    %c0_3 = arith.constant 0 : index
    %c0_4 = arith.constant 0 : index
    %4 = vector.load %arg4[%c0_3, %c0_4] : memref<16x64xf32, #tpu.memory_space<vmem>>, vector<16x64xf32>
    %5 = arith.mulf %3, %4 : vector<16x64xf32>
    %6 = vector.extract_strided_slice %2 {offsets = [0, 64], sizes = [16, 64], strides = [1, 1]} : vector<16x128xf32> to vector<16x64xf32>
    %c0_5 = arith.constant 0 : index
    %c0_6 = arith.constant 0 : index
    %7 = vector.load %arg5[%c0_5, %c0_6] : memref<16x64xf32, #tpu.memory_space<vmem>>, vector<16x64xf32>
    %8 = arith.mulf %6, %7 : vector<16x64xf32>
    %9 = arith.addf %5, %8 : vector<16x64xf32>
    %10 = arith.truncf %9 : vector<16x64xf32> to vector<16x64xbf16>
    %11 = vector.extract_strided_slice %10 {offsets = [0, 0], sizes = [16, 32], strides = [1, 1]} : vector<16x64xbf16> to vector<16x32xbf16>
    %12 = vector.shape_cast %11 : vector<16x32xbf16> to vector<16x4x8xbf16>
    %13 = tpu.transpose %12, [1, 0, 2] : vector<16x4x8xbf16> -> vector<4x16x8xbf16>
    %14 = vector.extract_strided_slice %10 {offsets = [0, 32], sizes = [16, 16], strides = [1, 1]} : vector<16x64xbf16> to vector<16x16xbf16>
    %15 = vector.shape_cast %14 : vector<16x16xbf16> to vector<16x2x8xbf16>
    %16 = tpu.transpose %15, [1, 0, 2] : vector<16x2x8xbf16> -> vector<2x16x8xbf16>
    %17 = vector.extract_strided_slice %10 {offsets = [0, 48], sizes = [16, 16], strides = [1, 1]} : vector<16x64xbf16> to vector<16x16xbf16>
    %18 = vector.shape_cast %17 : vector<16x16xbf16> to vector<16x2x8xbf16>
    %19 = tpu.transpose %18, [1, 0, 2] : vector<16x2x8xbf16> -> vector<2x16x8xbf16>
    %20 = vector.shape_cast %13 : vector<4x16x8xbf16> to vector<2x32x8xbf16>
    "tpu.trace_start"() <{level = 10 : i32, message = "jnd,jkd->jnk"}> : () -> ()
    %cst_7 = arith.constant dense<0.000000e+00> : vector<2x32x16xf32>
    %21 = tpu.matmul %20, %16, %cst_7 {dimension_numbers = #tpu.dot_dimension_numbers<[2], [2], [1], [1], [0, 0, 0, 1, 1, 1], [0], [0]>} : vector<2x32x8xbf16>, vector<2x16x8xbf16>, vector<2x32x16xf32> -> vector<2x32x16xf32>
    "tpu.trace_stop"() : () -> ()
    %c0_8 = arith.constant 0 : index
    %c0_9 = arith.constant 0 : index
    %22 = vector.load %arg6[%c0_8, %c0_9] : memref<32x16xf32, #tpu.memory_space<vmem>>, vector<32x16xf32>
    %23 = vector.shape_cast %22 : vector<32x16xf32> to vector<1x32x16xf32>
    %24 = vector.broadcast %23 : vector<1x32x16xf32> to vector<2x32x16xf32>
    %25 = arith.addf %21, %24 : vector<2x32x16xf32>
    %cst_10 = arith.constant dense<0xFF800000> : vector<2x32xf32>
    %26 = vector.multi_reduction <maximumf>, %25, %cst_10 [2] : vector<2x32x16xf32> to vector<2x32xf32>
    %27 = vector.shape_cast %26 : vector<2x32xf32> to vector<2x32x1xf32>
    %28 = vector.broadcast %27 : vector<2x32x1xf32> to vector<2x32x16xf32>
    %29 = arith.subf %25, %28 : vector<2x32x16xf32>
    %30 = math.exp %29 : vector<2x32x16xf32>
    %cst_11 = arith.constant dense<0.000000e+00> : vector<2x32xf32>
    %31 = vector.multi_reduction <add>, %30, %cst_11 [2] : vector<2x32x16xf32> to vector<2x32xf32>
    %32 = vector.shape_cast %31 : vector<2x32xf32> to vector<2x32x1xf32>
    %33 = tpu.reciprocal %32 {approx = true} : vector<2x32x1xf32> -> vector<2x32x1xf32>
    %34 = vector.broadcast %33 : vector<2x32x1xf32> to vector<2x32x16xf32>
    %35 = arith.mulf %30, %34 : vector<2x32x16xf32>
    %36 = arith.truncf %35 : vector<2x32x16xf32> to vector<2x32x16xbf16>
    "tpu.trace_start"() <{level = 10 : i32, message = "jnk,jkd->jnd"}> : () -> ()
    %cst_12 = arith.constant dense<0.000000e+00> : vector<2x32x8xf32>
    %37 = tpu.matmul %36, %19, %cst_12 {dimension_numbers = #tpu.dot_dimension_numbers<[2], [1], [1], [2], [0, 0, 0, 1, 1, 2], [0], [0]>} : vector<2x32x16xbf16>, vector<2x16x8xbf16>, vector<2x32x8xf32> -> vector<2x32x8xf32>
    "tpu.trace_stop"() : () -> ()
    %38 = vector.shape_cast %37 : vector<2x32x8xf32> to vector<4x16x8xf32>
    %39 = arith.truncf %38 : vector<4x16x8xf32> to vector<4x16x8xbf16>
    %c0_13 = arith.constant 0 : index
    %c0_14 = arith.constant 0 : index
    %c0_15 = arith.constant 0 : index
    %40 = vector.load %arg3[%c0_13, %c0_14, %c0_15] : memref<4x8x32xbf16, #tpu.memory_space<vmem>>, vector<4x8x32xbf16>
    "tpu.trace_start"() <{level = 10 : i32, message = "hnd,hdo->hno"}> : () -> ()
    %cst_16 = arith.constant dense<0.000000e+00> : vector<4x16x32xf32>
    %41 = tpu.matmul %39, %40, %cst_16 {dimension_numbers = #tpu.dot_dimension_numbers<[2], [1], [1], [2], [0, 0, 0, 1, 1, 2], [0], [0]>} : vector<4x16x8xbf16>, vector<4x8x32xbf16>, vector<4x16x32xf32> -> vector<4x16x32xf32>
    "tpu.trace_stop"() : () -> ()
    %cst_17 = arith.constant dense<0.000000e+00> : vector<16x32xf32>
    %42 = vector.multi_reduction <add>, %41, %cst_17 [0] : vector<4x16x32xf32> to vector<16x32xf32>
    %c0_18 = arith.constant 0 : index
    %c0_19 = arith.constant 0 : index
    %43 = vector.load %arg7[%c0_18, %c0_19] : memref<16x32xf32, #tpu.memory_space<vmem>>, vector<16x32xf32>
    tpu.vector_store %arg7[%c0_18, %c0_19], %42 {strides = array<i32>} : memref<16x32xf32, #tpu.memory_space<vmem>>, vector<16x32xf32>,
    return
  }
  func.func @transform_0(%arg0: i32) -> (i32, i32) {
    %c0_i32 = arith.constant 0 : i32
    %c0_i32_0 = arith.constant 0 : i32
    %c0_i32_1 = arith.constant 0 : i32
    return %c0_i32, %c0_i32_0 : i32, i32
  }
  func.func @transform_1(%arg0: i32) -> (i32, i32) {
    %c0_i32 = arith.constant 0 : i32
    %c0_i32_0 = arith.constant 0 : i32
    %c0_i32_1 = arith.constant 0 : i32
    return %c0_i32, %c0_i32_0 : i32, i32
  }
  func.func @transform_2(%arg0: i32) -> (i32, i32, i32) {
    %c0_i32 = arith.constant 0 : i32
    %c0_i32_0 = arith.constant 0 : i32
    %c0_i32_1 = arith.constant 0 : i32
    %c0_i32_2 = arith.constant 0 : i32
    return %c0_i32, %c0_i32_0, %c0_i32_1 : i32, i32, i32
  }
  func.func @transform_3(%arg0: i32) -> (i32, i32) {
    %c0_i32 = arith.constant 0 : i32
    %c0_i32_0 = arith.constant 0 : i32
    %c0_i32_1 = arith.constant 0 : i32
    return %c0_i32, %c0_i32_0 : i32, i32
  }
  func.func @transform_4(%arg0: i32) -> (i32, i32) {
    %c0_i32 = arith.constant 0 : i32
    %c0_i32_0 = arith.constant 0 : i32
    %c0_i32_1 = arith.constant 0 : i32
    return %c0_i32, %c0_i32_0 : i32, i32
  }
  func.func @transform_5(%arg0: i32) -> (i32, i32) {
    %c0_i32 = arith.constant 0 : i32
    %c0_i32_0 = arith.constant 0 : i32
    %c0_i32_1 = arith.constant 0 : i32
    return %c0_i32, %c0_i32_0 : i32, i32
  }
  func.func @transform_6(%arg0: i32) -> (i32, i32) {
    %c0_i32 = arith.constant 0 : i32
    %c0_i32_0 = arith.constant 0 : i32
    %c0_i32_1 = arith.constant 0 : i32
    return %c0_i32, %c0_i32_0 : i32, i32
  }
}

module attributes {stable_mosaic.version = 11 : i64} {
  func.func @_attn_kernel(%arg0: i32, %arg1: memref<16x32xbf16, #tpu.memory_space<vmem>>, %arg2: memref<32x128xbf16, #tpu.memory_space<vmem>>, %arg3: memref<4x8x32xbf16, #tpu.memory_space<vmem>>, %arg4: memref<16x64xf32, #tpu.memory_space<vmem>>, %arg5: memref<16x64xf32, #tpu.memory_space<vmem>>, %arg6: memref<32x16xf32, #tpu.memory_space<vmem>>, %arg7: memref<16x32xf32, #tpu.memory_space<vmem>>) attributes {dimension_semantics = [#tpu.dimension_semantics<arbitrary>], iteration_bounds = array<i64: 1>, scalar_prefetch = 0 : i64, scratch_operands = 0 : i64, tpu.core_type = #tpu.core_type<tc>, window_params = [{pipeline_mode = #tpu.pipeline_mode<synchronous>, transform_indices = @transform_0, window_bounds = array<i64: 16, 32>}, {pipeline_mode = #tpu.pipeline_mode<synchronous>, transform_indices = @transform_1, window_bounds = array<i64: 32, 128>}, {pipeline_mode = #tpu.pipeline_mode<synchronous>, transform_indices = @transform_2, window_bounds = array<i64: 4, 8, 32>}, {pipeline_mode = #tpu.pipeline_mode<synchronous>, transform_indices = @transform_3, window_bounds = array<i64: 16, 64>}, {pipeline_mode = #tpu.pipeline_mode<synchronous>, transform_indices = @transform_4, window_bounds = array<i64: 16, 64>}, {pipeline_mode = #tpu.pipeline_mode<synchronous>, transform_indices = @transform_5, window_bounds = array<i64: 32, 16>}, {pipeline_mode = #tpu.pipeline_mode<synchronous>, transform_indices = @transform_6, window_bounds = array<i64: 16, 32>}]} {
    %c0 = arith.constant 0 : index
    %c0_0 = arith.constant 0 : index
    %0 = vector.load %arg1[%c0, %c0_0] : memref<16x32xbf16, #tpu.memory_space<vmem>>, vector<16x32xbf16>
    %c0_1 = arith.constant 0 : index
    %c0_2 = arith.constant 0 : index
    %1 = vector.load %arg2[%c0_1, %c0_2] : memref<32x128xbf16, #tpu.memory_space<vmem>>, vector<32x128xbf16>
    %cst = arith.constant dense<0.000000e+00> : vector<16x128xf32>
    %2 = tpu.matmul %0, %1, %cst {dimension_numbers = #tpu.dot_dimension_numbers<[1], [0], [0], [1], [0, 0, 1, 1], [], []>} : vector<16x32xbf16>, vector<32x128xbf16>, vector<16x128xf32> -> vector<16x128xf32>
    %3 = vector.extract_strided_slice %2 {offsets = [0, 0], sizes = [16, 64], strides = [1, 1]} : vector<16x128xf32> to vector<16x64xf32>
    %c0_3 = arith.constant 0 : index
    %c0_4 = arith.constant 0 : index
    %4 = vector.load %arg4[%c0_3, %c0_4] : memref<16x64xf32, #tpu.memory_space<vmem>>, vector<16x64xf32>
    %5 = arith.mulf %3, %4 : vector<16x64xf32>
    %6 = vector.extract_strided_slice %2 {offsets = [0, 64], sizes = [16, 64], strides = [1, 1]} : vector<16x128xf32> to vector<16x64xf32>
    %c0_5 = arith.constant 0 : index
    %c0_6 = arith.constant 0 : index
    %7 = vector.load %arg5[%c0_5, %c0_6] : memref<16x64xf32, #tpu.memory_space<vmem>>, vector<16x64xf32>
    %8 = arith.mulf %6, %7 : vector<16x64xf32>
    %9 = arith.addf %5, %8 : vector<16x64xf32>
    %10 = arith.truncf %9 : vector<16x64xf32> to vector<16x64xbf16>
    %11 = vector.extract_strided_slice %10 {offsets = [0, 0], sizes = [16, 8], strides = [1, 1]} : vector<16x64xbf16> to vector<16x8xbf16>
    %12 = vector.extract_strided_slice %10 {offsets = [0, 8], sizes = [16, 8], strides = [1, 1]} : vector<16x64xbf16> to vector<16x8xbf16>
    %13 = vector.extract_strided_slice %10 {offsets = [0, 16], sizes = [16, 8], strides = [1, 1]} : vector<16x64xbf16> to vector<16x8xbf16>
    %14 = vector.extract_strided_slice %10 {offsets = [0, 24], sizes = [16, 8], strides = [1, 1]} : vector<16x64xbf16> to vector<16x8xbf16>
    %15 = vector.shape_cast %11 : vector<16x8xbf16> to vector<1x16x8xbf16>
    %16 = vector.shape_cast %12 : vector<16x8xbf16> to vector<1x16x8xbf16>
    %17 = vector.shape_cast %13 : vector<16x8xbf16> to vector<1x16x8xbf16>
    %18 = vector.shape_cast %14 : vector<16x8xbf16> to vector<1x16x8xbf16>
    %19 = tpu.concatenate %15, %16, %17, %18 in 0 : vector<1x16x8xbf16>, vector<1x16x8xbf16>, vector<1x16x8xbf16>, vector<1x16x8xbf16> -> vector<4x16x8xbf16>
    %20 = vector.extract_strided_slice %10 {offsets = [0, 32], sizes = [16, 8], strides = [1, 1]} : vector<16x64xbf16> to vector<16x8xbf16>
    %21 = vector.extract_strided_slice %10 {offsets = [0, 40], sizes = [16, 8], strides = [1, 1]} : vector<16x64xbf16> to vector<16x8xbf16>
    %22 = vector.shape_cast %20 : vector<16x8xbf16> to vector<1x16x8xbf16>
    %23 = vector.shape_cast %21 : vector<16x8xbf16> to vector<1x16x8xbf16>
    %24 = tpu.concatenate %22, %23 in 0 : vector<1x16x8xbf16>, vector<1x16x8xbf16> -> vector<2x16x8xbf16>
    %25 = vector.extract_strided_slice %10 {offsets = [0, 48], sizes = [16, 8], strides = [1, 1]} : vector<16x64xbf16> to vector<16x8xbf16>
    %26 = vector.extract_strided_slice %10 {offsets = [0, 56], sizes = [16, 8], strides = [1, 1]} : vector<16x64xbf16> to vector<16x8xbf16>
    %27 = vector.shape_cast %25 : vector<16x8xbf16> to vector<1x16x8xbf16>
    %28 = vector.shape_cast %26 : vector<16x8xbf16> to vector<1x16x8xbf16>
    %29 = tpu.concatenate %27, %28 in 0 : vector<1x16x8xbf16>, vector<1x16x8xbf16> -> vector<2x16x8xbf16>
    %30 = vector.shape_cast %19 : vector<4x16x8xbf16> to vector<2x32x8xbf16>
    "tpu.trace_start"() <{level = 10 : i32, message = "jnd,jkd->jnk"}> : () -> ()
    %cst_7 = arith.constant dense<0.000000e+00> : vector<2x32x16xf32>
    %31 = tpu.matmul %30, %24, %cst_7 {dimension_numbers = #tpu.dot_dimension_numbers<[2], [2], [1], [1], [0, 0, 0, 1, 1, 1], [0], [0]>} : vector<2x32x8xbf16>, vector<2x16x8xbf16>, vector<2x32x16xf32> -> vector<2x32x16xf32>
    "tpu.trace_stop"() : () -> ()
    %c0_8 = arith.constant 0 : index
    %c0_9 = arith.constant 0 : index
    %32 = vector.load %arg6[%c0_8, %c0_9] : memref<32x16xf32, #tpu.memory_space<vmem>>, vector<32x16xf32>
    %33 = vector.shape_cast %32 : vector<32x16xf32> to vector<1x32x16xf32>
    %34 = vector.broadcast %33 : vector<1x32x16xf32> to vector<2x32x16xf32>
    %35 = arith.addf %31, %34 : vector<2x32x16xf32>
    %cst_10 = arith.constant dense<0xFF800000> : vector<2x32xf32>
    %36 = vector.multi_reduction <maximumf>, %35, %cst_10 [2] : vector<2x32x16xf32> to vector<2x32xf32>
    %37 = vector.shape_cast %36 : vector<2x32xf32> to vector<2x32x1xf32>
    %38 = vector.broadcast %37 : vector<2x32x1xf32> to vector<2x32x16xf32>
    %39 = arith.subf %35, %38 : vector<2x32x16xf32>
    %40 = math.exp %39 : vector<2x32x16xf32>
    %cst_11 = arith.constant dense<0.000000e+00> : vector<2x32xf32>
    %41 = vector.multi_reduction <add>, %40, %cst_11 [2] : vector<2x32x16xf32> to vector<2x32xf32>
    %42 = vector.shape_cast %41 : vector<2x32xf32> to vector<2x32x1xf32>
    %43 = tpu.reciprocal %42 {approx = true} : vector<2x32x1xf32> -> vector<2x32x1xf32>
    %44 = vector.broadcast %43 : vector<2x32x1xf32> to vector<2x32x16xf32>
    %45 = arith.mulf %40, %44 : vector<2x32x16xf32>
    %46 = arith.truncf %45 : vector<2x32x16xf32> to vector<2x32x16xbf16>
    "tpu.trace_start"() <{level = 10 : i32, message = "jnk,jkd->jnd"}> : () -> ()
    %cst_12 = arith.constant dense<0.000000e+00> : vector<2x32x8xf32>
    %47 = tpu.matmul %46, %29, %cst_12 {dimension_numbers = #tpu.dot_dimension_numbers<[2], [1], [1], [2], [0, 0, 0, 1, 1, 2], [0], [0]>} : vector<2x32x16xbf16>, vector<2x16x8xbf16>, vector<2x32x8xf32> -> vector<2x32x8xf32>
    "tpu.trace_stop"() : () -> ()
    %48 = vector.shape_cast %47 : vector<2x32x8xf32> to vector<4x16x8xf32>
    %49 = arith.truncf %48 : vector<4x16x8xf32> to vector<4x16x8xbf16>
    %c0_13 = arith.constant 0 : index
    %c0_14 = arith.constant 0 : index
    %c0_15 = arith.constant 0 : index
    %50 = vector.load %arg3[%c0_13, %c0_14, %c0_15] : memref<4x8x32xbf16, #tpu.memory_space<vmem>>, vector<4x8x32xbf16>
    "tpu.trace_start"() <{level = 10 : i32, message = "hnd,hdo->hno"}> : () -> ()
    %cst_16 = arith.constant dense<0.000000e+00> : vector<4x16x32xf32>
    %51 = tpu.matmul %49, %50, %cst_16 {dimension_numbers = #tpu.dot_dimension_numbers<[2], [1], [1], [2], [0, 0, 0, 1, 1, 2], [0], [0]>} : vector<4x16x8xbf16>, vector<4x8x32xbf16>, vector<4x16x32xf32> -> vector<4x16x32xf32>
    "tpu.trace_stop"() : () -> ()
    %cst_17 = arith.constant dense<0.000000e+00> : vector<16x32xf32>
    %52 = vector.multi_reduction <add>, %51, %cst_17 [0] : vector<4x16x32xf32> to vector<16x32xf32>
    %c0_18 = arith.constant 0 : index
    %c0_19 = arith.constant 0 : index
    %53 = vector.load %arg7[%c0_18, %c0_19] : memref<16x32xf32, #tpu.memory_space<vmem>>, vector<16x32xf32>
    tpu.vector_store %arg7[%c0_18, %c0_19], %52 {strides = array<i32>} : memref<16x32xf32, #tpu.memory_space<vmem>>, vector<16x32xf32>,
    return
  }
  func.func @transform_0(%arg0: i32) -> (i32, i32) {
    %c0_i32 = arith.constant 0 : i32
    %c0_i32_0 = arith.constant 0 : i32
    %c0_i32_1 = arith.constant 0 : i32
    return %c0_i32, %c0_i32_0 : i32, i32
  }
  func.func @transform_1(%arg0: i32) -> (i32, i32) {
    %c0_i32 = arith.constant 0 : i32
    %c0_i32_0 = arith.constant 0 : i32
    %c0_i32_1 = arith.constant 0 : i32
    return %c0_i32, %c0_i32_0 : i32, i32
  }
  func.func @transform_2(%arg0: i32) -> (i32, i32, i32) {
    %c0_i32 = arith.constant 0 : i32
    %c0_i32_0 = arith.constant 0 : i32
    %c0_i32_1 = arith.constant 0 : i32
    %c0_i32_2 = arith.constant 0 : i32
    return %c0_i32, %c0_i32_0, %c0_i32_1 : i32, i32, i32
  }
  func.func @transform_3(%arg0: i32) -> (i32, i32) {
    %c0_i32 = arith.constant 0 : i32
    %c0_i32_0 = arith.constant 0 : i32
    %c0_i32_1 = arith.constant 0 : i32
    return %c0_i32, %c0_i32_0 : i32, i32
  }
  func.func @transform_4(%arg0: i32) -> (i32, i32) {
    %c0_i32 = arith.constant 0 : i32
    %c0_i32_0 = arith.constant 0 : i32
    %c0_i32_1 = arith.constant 0 : i32
    return %c0_i32, %c0_i32_0 : i32, i32
  }
  func.func @transform_5(%arg0: i32) -> (i32, i32) {
    %c0_i32 = arith.constant 0 : i32
    %c0_i32_0 = arith.constant 0 : i32
    %c0_i32_1 = arith.constant 0 : i32
    return %c0_i32, %c0_i32_0 : i32, i32
  }
  func.func @transform_6(%arg0: i32) -> (i32, i32) {
    %c0_i32 = arith.constant 0 : i32
    %c0_i32_0 = arith.constant 0 : i32
    %c0_i32_1 = arith.constant 0 : i32
    return %c0_i32, %c0_i32_0 : i32, i32
  }
}

</mosaic_0001>

<llo_original>
// kernel: tpu_custom_call.1
$region0: #{tpu_custom_call.1}
  #allocation0 [shape = 'u32[]', space=smem, size = 0x4, offset = 0x4, fixed_abs, tag = 'smem constant byte address 0x4 - core index']
  #allocation1 [shape = 'u32[144,128]{1,0:T(1,128)}', space=vmem, size = 0x12000, scoped, tag = 'internal scratch']
  %s0 = inlined_call_operand.hbm [shape: bf16[16,32], index: 0, kind: input, shape index: {}]
  %s1 = inlined_call_operand.vmem [shape: bf16[32,128], index: 1, kind: input, shape index: {}]
  %s2 = inlined_call_operand.vmem [shape: bf16[4,8,32], index: 2, kind: input, shape index: {}]
  %s3 = inlined_call_operand.vmem [shape: f32[16,64], index: 3, kind: input, shape index: {}]
  %s4 = inlined_call_operand.hbm [shape: f32[16,64], index: 4, kind: input, shape index: {}]
  %s5 = inlined_call_operand.vmem [shape: f32[32,16], index: 5, kind: input, shape index: {}]
  %s6 = inlined_call_operand.hbm [shape: f32[16,32], index: 6, kind: output, shape index: {}]
  %s7 = sld [smem:[#allocation0]]
  $region42: #{tpu_custom_call.1} parent=0
    _
  %s9 = ssub.s32 1, %s7
  %s10 = scalar_select 0, %s9, %s7
  $region1: #{tpu_custom_call.1} parent=0
    #allocation2 [shape = 'u8[4096]{0}', space=vmem, size = 0x1000, scoped, tag = 'input window, operand 0, single buffered']
    #allocation3 [shape = 's32[1]{0}', space=sflag, size = 0x4, scoped, tag = 'scoped memory for tpu_custom_call.1']
    #allocation4 [shape = 's32[1]{0}', space=sflag, size = 0x4, scoped, tag = 'scoped memory for tpu_custom_call.1']
    #allocation5 [shape = 'u8[8192]{0}', space=vmem, size = 0x2000, scoped, tag = 'input window, operand 4, single buffered']
    #allocation6 [shape = 's32[1]{0}', space=sflag, size = 0x4, scoped, tag = 'scoped memory for tpu_custom_call.1']
    #allocation7 [shape = 'u8[8192]{0}', space=vmem, size = 0x2000, scoped, tag = 'output window, operand 0, single buffered']
    %11 = vsyncpa [#allocation3], 0
    %12 = vsyncpa [#allocation6], 0
    %13 = vsyncpa [#allocation4], 0
    // Predicated region
    $region2: #{tpu_custom_call.1} parent=1 // pred_check
      _
    $region3: #{tpu_custom_call.1} parent=1 // pred_check_branch
      %15 = sbr.rel (0) target = $region5
    $region4: #{tpu_custom_call.1} parent=1 // pred_region
      %s17 = ssub.s32 128, 128
      %18 = vsyncadd [#allocation3], %s17
      %s19 = sshll.u32 [#allocation2], 4
      %s20 = int_to_ptr.vmem [resolvable:$true] %s19
      %25 = dma.hbm_to_vmem [thread:$0]  %s0, 128, %s20, [#allocation3], 64, 64, 4
    $region5: #{tpu_custom_call.1} parent=1 // pred_fallthru
      _
    // Predicated region
    $region6: #{tpu_custom_call.1} parent=1 // pred_check
      _
    $region7: #{tpu_custom_call.1} parent=1 // pred_check_branch
      %27 = sbr.rel (0) target = $region9
    $region8: #{tpu_custom_call.1} parent=1 // pred_region
      _
    $region9: #{tpu_custom_call.1} parent=1 // pred_fallthru
      _
    // Predicated region
    $region10: #{tpu_custom_call.1} parent=1 // pred_check
      _
    $region11: #{tpu_custom_call.1} parent=1 // pred_check_branch
      %29 = sbr.rel (0) target = $region13
    $region12: #{tpu_custom_call.1} parent=1 // pred_region
      _
    $region13: #{tpu_custom_call.1} parent=1 // pred_fallthru
      _
    // Predicated region
    $region14: #{tpu_custom_call.1} parent=1 // pred_check
      _
    $region15: #{tpu_custom_call.1} parent=1 // pred_check_branch
      %31 = sbr.rel (0) target = $region17
    $region16: #{tpu_custom_call.1} parent=1 // pred_region
      _
    $region17: #{tpu_custom_call.1} parent=1 // pred_fallthru
      _
    // Predicated region
    $region18: #{tpu_custom_call.1} parent=1 // pred_check
      _
    $region19: #{tpu_custom_call.1} parent=1 // pred_check_branch
      %33 = sbr.rel (0) target = $region21
    $region20: #{tpu_custom_call.1} parent=1 // pred_region
      %s35 = ssub.s32 256, 256
      %36 = vsyncadd [#allocation6], %s35
      %s37 = sshll.u32 [#allocation5], 4
      %s38 = int_to_ptr.vmem [resolvable:$true] %s37
      %43 = dma.hbm_to_vmem [thread:$0]  %s4, 256, %s38, [#allocation6], 128, 128, 8
    $region21: #{tpu_custom_call.1} parent=1 // pred_fallthru
      _
    // Predicated region
    $region22: #{tpu_custom_call.1} parent=1 // pred_check
      _
    $region23: #{tpu_custom_call.1} parent=1 // pred_check_branch
      %45 = sbr.rel (0) target = $region25
    $region24: #{tpu_custom_call.1} parent=1 // pred_region
      _
    $region25: #{tpu_custom_call.1} parent=1 // pred_fallthru
      _
    // Predicated region
    $region26: #{tpu_custom_call.1} parent=1 // pred_check
      _
    $region27: #{tpu_custom_call.1} parent=1 // pred_check_branch
      %47 = sbr.rel (0) target = $region29
    $region28: #{tpu_custom_call.1} parent=1 // pred_region
      %48 = dma.done [#allocation3], 128
    $region29: #{tpu_custom_call.1} parent=1 // pred_fallthru
      _
    // Predicated region
    $region30: #{tpu_custom_call.1} parent=1 // pred_check
      _
    $region31: #{tpu_custom_call.1} parent=1 // pred_check_branch
      %50 = sbr.rel (0) target = $region33
    $region32: #{tpu_custom_call.1} parent=1 // pred_region
      %51 = dma.done [#allocation6], 256
    $region33: #{tpu_custom_call.1} parent=1 // pred_fallthru
      _
    %v53 = vld [vmem:[#allocation2] sm:$0xf]
    %v54 = vld [vmem:[#allocation2 + $0x4] sm:$0xf]
    %v55 = vld [vmem:[%s1] sm:$0xf]
    %v56 = vld [vmem:[%s1 + $0x4] sm:$0xf]
    %v57 = vld [vmem:[%s1 + $0x8] sm:$0xf]
    %v58 = vld [vmem:[%s1 + $0xc] sm:$0xf]
    %v61 = vunpack.c.l.b16 %v53
    %v62 = vunpack.c.l.b16 %v54
    %v63 = vpack.c.b16 %v62, %v61
    %v68 = vunpack.c.l.b16 %v55
    %v69 = vunpack.c.l.b16 %v56
    %v70 = vunpack.c.l.b16 %v57
    %v71 = vunpack.c.l.b16 %v58
    %v72 = vpack.c.b16 %v69, %v68
    %v73 = vpack.c.b16 %v71, %v70
    %vm76 = vcmask 261120
    %v78 = vsel %vm76, %v63, 0
    %80 = vmatprep.subr.bf16.mxu0 0
    %81 = vmatpush1.bf16.msra.mxu0 %v72
    %82 = vmatprep.subr.bf16.mxu0 0
    %83 = vmatpush1.bf16.msra.mxu0 %v73
    %84 = vmatprep.subr.bf16.mxu0 0
    %85 = vmatpush1.bf16.msra.mxu0 0
    %86 = vmatprep.subr.bf16.mxu0 0
    %87 = vmatpush1.bf16.msra.mxu0 0
    %88 = vmatprep.subr.bf16.mxu0 0
    %89 = vmatpush1.bf16.msra.mxu0 0
    %90 = vmatprep.subr.bf16.mxu0 0
    %91 = vmatpush1.bf16.msra.mxu0 0
    %92 = vmatprep.subr.bf16.mxu0 0
    %93 = vmatpush1.bf16.msra.mxu0 0
    %94 = vmatprep.subr.bf16.mxu0 0
    %95 = vmatpush1.bf16.msra.mxu0 0
    %96 = vmatprep.subr.bf16.mxu0 0
    %97 = vmatpush1.bf16.msra.mxu0 0
    %98 = vmatprep.subr.bf16.mxu0 0
    %99 = vmatpush1.bf16.msra.mxu0 0
    %100 = vmatprep.subr.bf16.mxu0 0
    %101 = vmatpush1.bf16.msra.mxu0 0
    %102 = vmatprep.subr.bf16.mxu0 0
    %103 = vmatpush1.bf16.msra.mxu0 0
    %104 = vmatprep.subr.bf16.mxu0 0
    %105 = vmatpush1.bf16.msra.mxu0 0
    %106 = vmatprep.subr.bf16.mxu0 0
    %107 = vmatpush1.bf16.msra.mxu0 0
    %108 = vmatprep.subr.bf16.mxu0 0
    %109 = vmatpush1.bf16.msra.mxu0 0
    %110 = vmatprep.subr.bf16.mxu0 0
    %111 = vmatpush1.bf16.msra.mxu0 0
    %112 = vmatprep.mubr.bf16.mxu0 0
    %113 = vmatmul.mubr.bf16.gmra.mrb[0].mxu0 %v78
    %v114 = vpop.f32.mrb[0].mxu0
    %v115 = vadd.f32 0.0, %v114
    %v116 = vpop.f32.mrb[0].mxu0
    %v117 = vpop.f32.mrb[0].mxu0
    %v118 = vadd.f32 0.0, %v117
    %v119 = vpop.f32.mrb[0].mxu0
    %120 = vdwg.mxu0
    %v121 = vld [vmem:[%s3] sm:$0xff]
    %v122 = vld [vmem:[%s3 + $0x8] sm:$0xff]
    %v123 = vmul.f32 %v115, %v121
    %v124 = vmul.f32 %v118, %v122
    %v125 = vld [vmem:[#allocation5] sm:$0xff]
    %v126 = vld [vmem:[#allocation5 + $0x8] sm:$0xff]
    %129 = vrot.lane.b32.xlu0 %v125, 64
    %v130 = vpop.permute.xlu0 %129
    %131 = vrot.lane.b32.xlu0 %v126, 64
    %v132 = vpop.permute.xlu0 %131
    %v135 = vmul.f32 %v115, %v130
    %v136 = vmul.f32 %v118, %v132
    %139 = vrot.lane.b32.xlu0 %v135, 64
    %v140 = vpop.permute.xlu0 %139
    %141 = vrot.lane.b32.xlu0 %v136, 64
    %v142 = vpop.permute.xlu0 %141
    %v145 = vadd.f32 %v123, %v140
    %v146 = vadd.f32 %v124, %v142
    %v147 = vpack.c.bf16 %v146, %v145
    %149 = vrot.lane.b32.xlu0 %v147, 120
    %v150 = vpop.permute.xlu0 %149
    %151 = vrot.lane.b32.xlu0 %v147, 112
    %v152 = vpop.permute.xlu0 %151
    %153 = vrot.lane.b32.xlu0 %v147, 104
    %v154 = vpop.permute.xlu0 %153
    %v157 = vpack.i.b16 %v150, %v147
    %v159 = vshrl.u32 %v147, 16
    %v160 = vshrl.u32 %v150, 16
    %v161 = vpack.i.b16 %v160, %v159
    %v165 = vpack.i.b16 %v154, %v152
    %v167 = vshrl.u32 %v152, 16
    %v168 = vshrl.u32 %v154, 16
    %v169 = vpack.i.b16 %v168, %v167
    %v172 = vpack.i.b16 0, 0
    %v174 = vshrl.u32 0, 16
    %v175 = vpack.i.b16 %v174, %v174
    %v177 = vcombine.high %v157, %v172
    %v179 = vunpack.c.l.s4 1983009808
    %v180 = vunpack.c.0.s8 %v179
    %v181 = vlaneseq
    %v182 = vshrl.u32 %v181, 7
    %v183 = vsub.s32 %v180, %v182
    %v184 = vrot.slane %v157, %v183
    %v186 = vunpack.c.l.s4 1983009808
    %v187 = vunpack.c.0.s8 %v186
    %v188 = vlaneseq
    %v189 = vshrl.u32 %v188, 7
    %v190 = vsub.s32 %v187, %v189
    %v191 = vrot.slane %v177, %v190
    %v192 = vcombine.high %v165, %v172
    %v194 = vunpack.c.l.s4 1983009808
    %v195 = vunpack.c.0.s8 %v194
    %v196 = vlaneseq
    %v197 = vshrl.u32 %v196, 7
    %v198 = vsub.s32 %v195, %v197
    %v199 = vrot.slane %v165, %v198
    %v201 = vunpack.c.l.s4 1983009808
    %v202 = vunpack.c.0.s8 %v201
    %v203 = vlaneseq
    %v204 = vshrl.u32 %v203, 7
    %v205 = vsub.s32 %v202, %v204
    %v206 = vrot.slane %v192, %v205
    %v207 = vcombine.low %v184, %v199
    %v208 = vcombine.high %v184, %v199
    %v210 = vunpack.c.l.s4 1934713408
    %v211 = vunpack.c.0.s8 %v210
    %v212 = vlaneseq
    %v213 = vshrl.u32 %v212, 7
    %v214 = vsub.s32 %v211, %v213
    %v215 = vrot.slane %v207, %v214
    %v217 = vunpack.c.l.s4 1934713408
    %v218 = vunpack.c.0.s8 %v217
    %v219 = vlaneseq
    %v220 = vshrl.u32 %v219, 7
    %v221 = vsub.s32 %v218, %v220
    %v222 = vrot.slane %v208, %v221
    %v223 = vcombine.low %v191, %v206
    %v224 = vcombine.high %v191, %v206
    %v226 = vunpack.c.l.s4 1934713408
    %v227 = vunpack.c.0.s8 %v226
    %v228 = vlaneseq
    %v229 = vshrl.u32 %v228, 7
    %v230 = vsub.s32 %v227, %v229
    %v231 = vrot.slane %v223, %v230
    %v233 = vunpack.c.l.s4 1934713408
    %v234 = vunpack.c.0.s8 %v233
    %v235 = vlaneseq
    %v236 = vshrl.u32 %v235, 7
    %v237 = vsub.s32 %v234, %v236
    %v238 = vrot.slane %v224, %v237
    %v239 = vcombine.high %v215, 0
    %v240 = vcombine.high %v222, 0
    %v241 = vcombine.high %v231, 0
    %v242 = vcombine.high %v238, 0
    %v243 = vcombine.high %v161, %v175
    %v245 = vunpack.c.l.s4 1983009808
    %v246 = vunpack.c.0.s8 %v245
    %v247 = vlaneseq
    %v248 = vshrl.u32 %v247, 7
    %v249 = vsub.s32 %v246, %v248
    %v250 = vrot.slane %v161, %v249
    %v252 = vunpack.c.l.s4 1983009808
    %v253 = vunpack.c.0.s8 %v252
    %v254 = vlaneseq
    %v255 = vshrl.u32 %v254, 7
    %v256 = vsub.s32 %v253, %v255
    %v257 = vrot.slane %v243, %v256
    %v258 = vcombine.high %v169, %v175
    %v260 = vunpack.c.l.s4 1983009808
    %v261 = vunpack.c.0.s8 %v260
    %v262 = vlaneseq
    %v263 = vshrl.u32 %v262, 7
    %v264 = vsub.s32 %v261, %v263
    %v265 = vrot.slane %v169, %v264
    %v267 = vunpack.c.l.s4 1983009808
    %v268 = vunpack.c.0.s8 %v267
    %v269 = vlaneseq
    %v270 = vshrl.u32 %v269, 7
    %v271 = vsub.s32 %v268, %v270
    %v272 = vrot.slane %v258, %v271
    %v273 = vcombine.low %v250, %v265
    %v274 = vcombine.high %v250, %v265
    %v276 = vunpack.c.l.s4 1934713408
    %v277 = vunpack.c.0.s8 %v276
    %v278 = vlaneseq
    %v279 = vshrl.u32 %v278, 7
    %v280 = vsub.s32 %v277, %v279
    %v281 = vrot.slane %v273, %v280
    %v283 = vunpack.c.l.s4 1934713408
    %v284 = vunpack.c.0.s8 %v283
    %v285 = vlaneseq
    %v286 = vshrl.u32 %v285, 7
    %v287 = vsub.s32 %v284, %v286
    %v288 = vrot.slane %v274, %v287
    %v289 = vcombine.low %v257, %v272
    %v290 = vcombine.high %v257, %v272
    %v292 = vunpack.c.l.s4 1934713408
    %v293 = vunpack.c.0.s8 %v292
    %v294 = vlaneseq
    %v295 = vshrl.u32 %v294, 7
    %v296 = vsub.s32 %v293, %v295
    %v297 = vrot.slane %v289, %v296
    %v299 = vunpack.c.l.s4 1934713408
    %v300 = vunpack.c.0.s8 %v299
    %v301 = vlaneseq
    %v302 = vshrl.u32 %v301, 7
    %v303 = vsub.s32 %v300, %v302
    %v304 = vrot.slane %v290, %v303
    %v305 = vcombine.high %v281, 0
    %v306 = vcombine.high %v288, 0
    %v307 = vcombine.high %v297, 0
    %v308 = vcombine.high %v304, 0
    %v309 = vcombine.low %v215, %v222
    %v311 = vunpack.c.l.s4 1983009808
    %v312 = vunpack.c.0.s8 %v311
    %v313 = vlaneseq
    %v314 = vshrl.u32 %v313, 7
    %v315 = vsub.s32 %v312, %v314
    %v316 = vrot.slane %v309, %v315
    %v317 = vcombine.low %v239, %v240
    %v319 = vunpack.c.l.s4 1983009808
    %v320 = vunpack.c.0.s8 %v319
    %v321 = vlaneseq
    %v322 = vshrl.u32 %v321, 7
    %v323 = vsub.s32 %v320, %v322
    %v324 = vrot.slane %v317, %v323
    %v325 = vcombine.low %v231, %v238
    %v327 = vunpack.c.l.s4 1983009808
    %v328 = vunpack.c.0.s8 %v327
    %v329 = vlaneseq
    %v330 = vshrl.u32 %v329, 7
    %v331 = vsub.s32 %v328, %v330
    %v332 = vrot.slane %v325, %v331
    %v333 = vcombine.low %v241, %v242
    %v335 = vunpack.c.l.s4 1983009808
    %v336 = vunpack.c.0.s8 %v335
    %v337 = vlaneseq
    %v338 = vshrl.u32 %v337, 7
    %v339 = vsub.s32 %v336, %v338
    %v340 = vrot.slane %v333, %v339
    %v341 = vcombine.low %v316, %v324
    %v343 = vunpack.c.l.s4 1934713408
    %v344 = vunpack.c.0.s8 %v343
    %v345 = vlaneseq
    %v346 = vshrl.u32 %v345, 7
    %v347 = vsub.s32 %v344, %v346
    %v348 = vrot.slane %v341, %v347
    %v349 = vcombine.low %v332, %v340
    %v351 = vunpack.c.l.s4 1934713408
    %v352 = vunpack.c.0.s8 %v351
    %v353 = vlaneseq
    %v354 = vshrl.u32 %v353, 7
    %v355 = vsub.s32 %v352, %v354
    %v356 = vrot.slane %v349, %v355
    %v357 = vcombine.low %v348, %v356
    %v358 = vcombine.high %v348, %v356
    %v359 = vcombine.low %v281, %v288
    %v361 = vunpack.c.l.s4 1983009808
    %v362 = vunpack.c.0.s8 %v361
    %v363 = vlaneseq
    %v364 = vshrl.u32 %v363, 7
    %v365 = vsub.s32 %v362, %v364
    %v366 = vrot.slane %v359, %v365
    %v367 = vcombine.low %v305, %v306
    %v369 = vunpack.c.l.s4 1983009808
    %v370 = vunpack.c.0.s8 %v369
    %v371 = vlaneseq
    %v372 = vshrl.u32 %v371, 7
    %v373 = vsub.s32 %v370, %v372
    %v374 = vrot.slane %v367, %v373
    %v375 = vcombine.low %v297, %v304
    %v377 = vunpack.c.l.s4 1983009808
    %v378 = vunpack.c.0.s8 %v377
    %v379 = vlaneseq
    %v380 = vshrl.u32 %v379, 7
    %v381 = vsub.s32 %v378, %v380
    %v382 = vrot.slane %v375, %v381
    %v383 = vcombine.low %v307, %v308
    %v385 = vunpack.c.l.s4 1983009808
    %v386 = vunpack.c.0.s8 %v385
    %v387 = vlaneseq
    %v388 = vshrl.u32 %v387, 7
    %v389 = vsub.s32 %v386, %v388
    %v390 = vrot.slane %v383, %v389
    %v391 = vcombine.low %v366, %v374
    %v393 = vunpack.c.l.s4 1934713408
    %v394 = vunpack.c.0.s8 %v393
    %v395 = vlaneseq
    %v396 = vshrl.u32 %v395, 7
    %v397 = vsub.s32 %v394, %v396
    %v398 = vrot.slane %v391, %v397
    %v399 = vcombine.low %v382, %v390
    %v401 = vunpack.c.l.s4 1934713408
    %v402 = vunpack.c.0.s8 %v401
    %v403 = vlaneseq
    %v404 = vshrl.u32 %v403, 7
    %v405 = vsub.s32 %v402, %v404
    %v406 = vrot.slane %v399, %v405
    %v407 = vcombine.low %v398, %v406
    %v408 = vcombine.high %v398, %v406
    %v411 = vpack.i.b16 %v407, %v357
    %v412 = vshrl.u32 %v357, 16
    %v413 = vshrl.u32 %v407, 16
    %v414 = vpack.i.b16 %v413, %v412
    %v417 = vpack.i.b16 %v408, %v358
    %v418 = vshrl.u32 %v358, 16
    %v419 = vshrl.u32 %v408, 16
    %v420 = vpack.i.b16 %v419, %v418
    %421 = vrot.lane.b32.xlu0 %v147, 96
    %v422 = vpop.permute.xlu0 %421
    %423 = vrot.lane.b32.xlu0 %v150, 96
    %v424 = vpop.permute.xlu0 %423
    %v427 = vpack.i.b16 %v424, %v422
    %v429 = vshrl.u32 %v422, 16
    %v430 = vshrl.u32 %v424, 16
    %v431 = vpack.i.b16 %v430, %v429
    %v433 = vcombine.high %v427, %v172
    %v435 = vunpack.c.l.s4 1983009808
    %v436 = vunpack.c.0.s8 %v435
    %v437 = vlaneseq
    %v438 = vshrl.u32 %v437, 7
    %v439 = vsub.s32 %v436, %v438
    %v440 = vrot.slane %v427, %v439
    %v442 = vunpack.c.l.s4 1983009808
    %v443 = vunpack.c.0.s8 %v442
    %v444 = vlaneseq
    %v445 = vshrl.u32 %v444, 7
    %v446 = vsub.s32 %v443, %v445
    %v447 = vrot.slane %v433, %v446
    %v448 = vcombine.high %v440, 0
    %v450 = vunpack.c.l.s4 1934713408
    %v451 = vunpack.c.0.s8 %v450
    %v452 = vlaneseq
    %v453 = vshrl.u32 %v452, 7
    %v454 = vsub.s32 %v451, %v453
    %v455 = vrot.slane %v440, %v454
    %v457 = vunpack.c.l.s4 1934713408
    %v458 = vunpack.c.0.s8 %v457
    %v459 = vlaneseq
    %v460 = vshrl.u32 %v459, 7
    %v461 = vsub.s32 %v458, %v460
    %v462 = vrot.slane %v448, %v461
    %v463 = vcombine.high %v447, 0
    %v465 = vunpack.c.l.s4 1934713408
    %v466 = vunpack.c.0.s8 %v465
    %v467 = vlaneseq
    %v468 = vshrl.u32 %v467, 7
    %v469 = vsub.s32 %v466, %v468
    %v470 = vrot.slane %v447, %v469
    %v472 = vunpack.c.l.s4 1934713408
    %v473 = vunpack.c.0.s8 %v472
    %v474 = vlaneseq
    %v475 = vshrl.u32 %v474, 7
    %v476 = vsub.s32 %v473, %v475
    %v477 = vrot.slane %v463, %v476
    %v478 = vcombine.high %v455, 0
    %v479 = vcombine.high %v462, 0
    %v480 = vcombine.high %v470, 0
    %v481 = vcombine.high %v477, 0
    %v482 = vcombine.high %v431, %v175
    %v484 = vunpack.c.l.s4 1983009808
    %v485 = vunpack.c.0.s8 %v484
    %v486 = vlaneseq
    %v487 = vshrl.u32 %v486, 7
    %v488 = vsub.s32 %v485, %v487
    %v489 = vrot.slane %v431, %v488
    %v491 = vunpack.c.l.s4 1983009808
    %v492 = vunpack.c.0.s8 %v491
    %v493 = vlaneseq
    %v494 = vshrl.u32 %v493, 7
    %v495 = vsub.s32 %v492, %v494
    %v496 = vrot.slane %v482, %v495
    %v497 = vcombine.high %v489, 0
    %v499 = vunpack.c.l.s4 1934713408
    %v500 = vunpack.c.0.s8 %v499
    %v501 = vlaneseq
    %v502 = vshrl.u32 %v501, 7
    %v503 = vsub.s32 %v500, %v502
    %v504 = vrot.slane %v489, %v503
    %v506 = vunpack.c.l.s4 1934713408
    %v507 = vunpack.c.0.s8 %v506
    %v508 = vlaneseq
    %v509 = vshrl.u32 %v508, 7
    %v510 = vsub.s32 %v507, %v509
    %v511 = vrot.slane %v497, %v510
    %v512 = vcombine.high %v496, 0
    %v514 = vunpack.c.l.s4 1934713408
    %v515 = vunpack.c.0.s8 %v514
    %v516 = vlaneseq
    %v517 = vshrl.u32 %v516, 7
    %v518 = vsub.s32 %v515, %v517
    %v519 = vrot.slane %v496, %v518
    %v521 = vunpack.c.l.s4 1934713408
    %v522 = vunpack.c.0.s8 %v521
    %v523 = vlaneseq
    %v524 = vshrl.u32 %v523, 7
    %v525 = vsub.s32 %v522, %v524
    %v526 = vrot.slane %v512, %v525
    %v527 = vcombine.high %v504, 0
    %v528 = vcombine.high %v511, 0
    %v529 = vcombine.high %v519, 0
    %v530 = vcombine.high %v526, 0
    %v531 = vcombine.low %v455, %v462
    %v533 = vunpack.c.l.s4 1983009808
    %v534 = vunpack.c.0.s8 %v533
    %v535 = vlaneseq
    %v536 = vshrl.u32 %v535, 7
    %v537 = vsub.s32 %v534, %v536
    %v538 = vrot.slane %v531, %v537
    %v539 = vcombine.low %v478, %v479
    %v541 = vunpack.c.l.s4 1983009808
    %v542 = vunpack.c.0.s8 %v541
    %v543 = vlaneseq
    %v544 = vshrl.u32 %v543, 7
    %v545 = vsub.s32 %v542, %v544
    %v546 = vrot.slane %v539, %v545
    %v547 = vcombine.low %v470, %v477
    %v549 = vunpack.c.l.s4 1983009808
    %v550 = vunpack.c.0.s8 %v549
    %v551 = vlaneseq
    %v552 = vshrl.u32 %v551, 7
    %v553 = vsub.s32 %v550, %v552
    %v554 = vrot.slane %v547, %v553
    %v555 = vcombine.low %v480, %v481
    %v557 = vunpack.c.l.s4 1983009808
    %v558 = vunpack.c.0.s8 %v557
    %v559 = vlaneseq
    %v560 = vshrl.u32 %v559, 7
    %v561 = vsub.s32 %v558, %v560
    %v562 = vrot.slane %v555, %v561
    %v563 = vcombine.low %v538, %v546
    %v565 = vunpack.c.l.s4 1934713408
    %v566 = vunpack.c.0.s8 %v565
    %v567 = vlaneseq
    %v568 = vshrl.u32 %v567, 7
    %v569 = vsub.s32 %v566, %v568
    %v570 = vrot.slane %v563, %v569
    %v571 = vcombine.low %v554, %v562
    %v573 = vunpack.c.l.s4 1934713408
    %v574 = vunpack.c.0.s8 %v573
    %v575 = vlaneseq
    %v576 = vshrl.u32 %v575, 7
    %v577 = vsub.s32 %v574, %v576
    %v578 = vrot.slane %v571, %v577
    %v579 = vcombine.low %v570, %v578
    %v580 = vcombine.low %v504, %v511
    %v582 = vunpack.c.l.s4 1983009808
    %v583 = vunpack.c.0.s8 %v582
    %v584 = vlaneseq
    %v585 = vshrl.u32 %v584, 7
    %v586 = vsub.s32 %v583, %v585
    %v587 = vrot.slane %v580, %v586
    %v588 = vcombine.low %v527, %v528
    %v590 = vunpack.c.l.s4 1983009808
    %v591 = vunpack.c.0.s8 %v590
    %v592 = vlaneseq
    %v593 = vshrl.u32 %v592, 7
    %v594 = vsub.s32 %v591, %v593
    %v595 = vrot.slane %v588, %v594
    %v596 = vcombine.low %v519, %v526
    %v598 = vunpack.c.l.s4 1983009808
    %v599 = vunpack.c.0.s8 %v598
    %v600 = vlaneseq
    %v601 = vshrl.u32 %v600, 7
    %v602 = vsub.s32 %v599, %v601
    %v603 = vrot.slane %v596, %v602
    %v604 = vcombine.low %v529, %v530
    %v606 = vunpack.c.l.s4 1983009808
    %v607 = vunpack.c.0.s8 %v606
    %v608 = vlaneseq
    %v609 = vshrl.u32 %v608, 7
    %v610 = vsub.s32 %v607, %v609
    %v611 = vrot.slane %v604, %v610
    %v612 = vcombine.low %v587, %v595
    %v614 = vunpack.c.l.s4 1934713408
    %v615 = vunpack.c.0.s8 %v614
    %v616 = vlaneseq
    %v617 = vshrl.u32 %v616, 7
    %v618 = vsub.s32 %v615, %v617
    %v619 = vrot.slane %v612, %v618
    %v620 = vcombine.low %v603, %v611
    %v622 = vunpack.c.l.s4 1934713408
    %v623 = vunpack.c.0.s8 %v622
    %v624 = vlaneseq
    %v625 = vshrl.u32 %v624, 7
    %v626 = vsub.s32 %v623, %v625
    %v627 = vrot.slane %v620, %v626
    %v628 = vcombine.low %v619, %v627
    %v631 = vpack.i.b16 %v628, %v579
    %v632 = vshrl.u32 %v579, 16
    %v633 = vshrl.u32 %v628, 16
    %v634 = vpack.i.b16 %v633, %v632
    %635 = vrot.lane.b32.xlu0 %v147, 80
    %v636 = vpop.permute.xlu0 %635
    %637 = vrot.lane.b32.xlu0 %v150, 80
    %v638 = vpop.permute.xlu0 %637
    %v641 = vpack.i.b16 %v638, %v636
    %v643 = vshrl.u32 %v636, 16
    %v644 = vshrl.u32 %v638, 16
    %v645 = vpack.i.b16 %v644, %v643
    %v647 = vcombine.high %v641, %v172
    %v649 = vunpack.c.l.s4 1983009808
    %v650 = vunpack.c.0.s8 %v649
    %v651 = vlaneseq
    %v652 = vshrl.u32 %v651, 7
    %v653 = vsub.s32 %v650, %v652
    %v654 = vrot.slane %v641, %v653
    %v656 = vunpack.c.l.s4 1983009808
    %v657 = vunpack.c.0.s8 %v656
    %v658 = vlaneseq
    %v659 = vshrl.u32 %v658, 7
    %v660 = vsub.s32 %v657, %v659
    %v661 = vrot.slane %v647, %v660
    %v662 = vcombine.high %v654, 0
    %v664 = vunpack.c.l.s4 1934713408
    %v665 = vunpack.c.0.s8 %v664
    %v666 = vlaneseq
    %v667 = vshrl.u32 %v666, 7
    %v668 = vsub.s32 %v665, %v667
    %v669 = vrot.slane %v654, %v668
    %v671 = vunpack.c.l.s4 1934713408
    %v672 = vunpack.c.0.s8 %v671
    %v673 = vlaneseq
    %v674 = vshrl.u32 %v673, 7
    %v675 = vsub.s32 %v672, %v674
    %v676 = vrot.slane %v662, %v675
    %v677 = vcombine.high %v661, 0
    %v679 = vunpack.c.l.s4 1934713408
    %v680 = vunpack.c.0.s8 %v679
    %v681 = vlaneseq
    %v682 = vshrl.u32 %v681, 7
    %v683 = vsub.s32 %v680, %v682
    %v684 = vrot.slane %v661, %v683
    %v686 = vunpack.c.l.s4 1934713408
    %v687 = vunpack.c.0.s8 %v686
    %v688 = vlaneseq
    %v689 = vshrl.u32 %v688, 7
    %v690 = vsub.s32 %v687, %v689
    %v691 = vrot.slane %v677, %v690
    %v692 = vcombine.high %v669, 0
    %v693 = vcombine.high %v676, 0
    %v694 = vcombine.high %v684, 0
    %v695 = vcombine.high %v691, 0
    %v696 = vcombine.high %v645, %v175
    %v698 = vunpack.c.l.s4 1983009808
    %v699 = vunpack.c.0.s8 %v698
    %v700 = vlaneseq
    %v701 = vshrl.u32 %v700, 7
    %v702 = vsub.s32 %v699, %v701
    %v703 = vrot.slane %v645, %v702
    %v705 = vunpack.c.l.s4 1983009808
    %v706 = vunpack.c.0.s8 %v705
    %v707 = vlaneseq
    %v708 = vshrl.u32 %v707, 7
    %v709 = vsub.s32 %v706, %v708
    %v710 = vrot.slane %v696, %v709
    %v711 = vcombine.high %v703, 0
    %v713 = vunpack.c.l.s4 1934713408
    %v714 = vunpack.c.0.s8 %v713
    %v715 = vlaneseq
    %v716 = vshrl.u32 %v715, 7
    %v717 = vsub.s32 %v714, %v716
    %v718 = vrot.slane %v703, %v717
    %v720 = vunpack.c.l.s4 1934713408
    %v721 = vunpack.c.0.s8 %v720
    %v722 = vlaneseq
    %v723 = vshrl.u32 %v722, 7
    %v724 = vsub.s32 %v721, %v723
    %v725 = vrot.slane %v711, %v724
    %v726 = vcombine.high %v710, 0
    %v728 = vunpack.c.l.s4 1934713408
    %v729 = vunpack.c.0.s8 %v728
    %v730 = vlaneseq
    %v731 = vshrl.u32 %v730, 7
    %v732 = vsub.s32 %v729, %v731
    %v733 = vrot.slane %v710, %v732
    %v735 = vunpack.c.l.s4 1934713408
    %v736 = vunpack.c.0.s8 %v735
    %v737 = vlaneseq
    %v738 = vshrl.u32 %v737, 7
    %v739 = vsub.s32 %v736, %v738
    %v740 = vrot.slane %v726, %v739
    %v741 = vcombine.high %v718, 0
    %v742 = vcombine.high %v725, 0
    %v743 = vcombine.high %v733, 0
    %v744 = vcombine.high %v740, 0
    %v745 = vcombine.low %v669, %v676
    %v747 = vunpack.c.l.s4 1983009808
    %v748 = vunpack.c.0.s8 %v747
    %v749 = vlaneseq
    %v750 = vshrl.u32 %v749, 7
    %v751 = vsub.s32 %v748, %v750
    %v752 = vrot.slane %v745, %v751
    %v753 = vcombine.low %v692, %v693
    %v755 = vunpack.c.l.s4 1983009808
    %v756 = vunpack.c.0.s8 %v755
    %v757 = vlaneseq
    %v758 = vshrl.u32 %v757, 7
    %v759 = vsub.s32 %v756, %v758
    %v760 = vrot.slane %v753, %v759
    %v761 = vcombine.low %v684, %v691
    %v763 = vunpack.c.l.s4 1983009808
    %v764 = vunpack.c.0.s8 %v763
    %v765 = vlaneseq
    %v766 = vshrl.u32 %v765, 7
    %v767 = vsub.s32 %v764, %v766
    %v768 = vrot.slane %v761, %v767
    %v769 = vcombine.low %v694, %v695
    %v771 = vunpack.c.l.s4 1983009808
    %v772 = vunpack.c.0.s8 %v771
    %v773 = vlaneseq
    %v774 = vshrl.u32 %v773, 7
    %v775 = vsub.s32 %v772, %v774
    %v776 = vrot.slane %v769, %v775
    %v777 = vcombine.low %v752, %v760
    %v779 = vunpack.c.l.s4 1934713408
    %v780 = vunpack.c.0.s8 %v779
    %v781 = vlaneseq
    %v782 = vshrl.u32 %v781, 7
    %v783 = vsub.s32 %v780, %v782
    %v784 = vrot.slane %v777, %v783
    %v785 = vcombine.low %v768, %v776
    %v787 = vunpack.c.l.s4 1934713408
    %v788 = vunpack.c.0.s8 %v787
    %v789 = vlaneseq
    %v790 = vshrl.u32 %v789, 7
    %v791 = vsub.s32 %v788, %v790
    %v792 = vrot.slane %v785, %v791
    %v793 = vcombine.low %v784, %v792
    %v794 = vcombine.low %v718, %v725
    %v796 = vunpack.c.l.s4 1983009808
    %v797 = vunpack.c.0.s8 %v796
    %v798 = vlaneseq
    %v799 = vshrl.u32 %v798, 7
    %v800 = vsub.s32 %v797, %v799
    %v801 = vrot.slane %v794, %v800
    %v802 = vcombine.low %v741, %v742
    %v804 = vunpack.c.l.s4 1983009808
    %v805 = vunpack.c.0.s8 %v804
    %v806 = vlaneseq
    %v807 = vshrl.u32 %v806, 7
    %v808 = vsub.s32 %v805, %v807
    %v809 = vrot.slane %v802, %v808
    %v810 = vcombine.low %v733, %v740
    %v812 = vunpack.c.l.s4 1983009808
    %v813 = vunpack.c.0.s8 %v812
    %v814 = vlaneseq
    %v815 = vshrl.u32 %v814, 7
    %v816 = vsub.s32 %v813, %v815
    %v817 = vrot.slane %v810, %v816
    %v818 = vcombine.low %v743, %v744
    %v820 = vunpack.c.l.s4 1983009808
    %v821 = vunpack.c.0.s8 %v820
    %v822 = vlaneseq
    %v823 = vshrl.u32 %v822, 7
    %v824 = vsub.s32 %v821, %v823
    %v825 = vrot.slane %v818, %v824
    %v826 = vcombine.low %v801, %v809
    %v828 = vunpack.c.l.s4 1934713408
    %v829 = vunpack.c.0.s8 %v828
    %v830 = vlaneseq
    %v831 = vshrl.u32 %v830, 7
    %v832 = vsub.s32 %v829, %v831
    %v833 = vrot.slane %v826, %v832
    %v834 = vcombine.low %v817, %v825
    %v836 = vunpack.c.l.s4 1934713408
    %v837 = vunpack.c.0.s8 %v836
    %v838 = vlaneseq
    %v839 = vshrl.u32 %v838, 7
    %v840 = vsub.s32 %v837, %v839
    %v841 = vrot.slane %v834, %v840
    %v842 = vcombine.low %v833, %v841
    %v845 = vpack.i.b16 %v842, %v793
    %v847 = vshrl.u32 %v793, 16
    %v848 = vshrl.u32 %v842, 16
    %v849 = vpack.i.b16 %v848, %v847
    %v851 = vld [vmem:[%s5] sm:$0xff]
    %v852 = vld [vmem:[%s5 + $0x8] sm:$0xff]
    %v853 = vld [vmem:[%s5 + $0x10] sm:$0xff]
    %v854 = vld [vmem:[%s5 + $0x18] sm:$0xff]
    %vm855 = vcmask 64512
    %v857 = vsel %vm855, %v411, 0
    %v860 = vsel %vm855, %v414, 0
    %v863 = vsel %vm855, %v631, 0
    %865 = vmatprep.subr.bf16.mxu0 0
    %866 = vmatpush1.bf16.xpose.msra.mxu0 %v863
    %867 = vmatprep.subr.bf16.mxu0 0
    %868 = vmatpush1.bf16.xpose.msra.mxu0 0
    %869 = vmatprep.subr.bf16.mxu0 0
    %870 = vmatpush1.bf16.xpose.msra.mxu0 0
    %871 = vmatprep.subr.bf16.mxu0 0
    %872 = vmatpush1.bf16.xpose.msra.mxu0 0
    %873 = vmatprep.subr.bf16.mxu0 0
    %874 = vmatpush1.bf16.xpose.msra.mxu0 0
    %875 = vmatprep.subr.bf16.mxu0 0
    %876 = vmatpush1.bf16.xpose.msra.mxu0 0
    %877 = vmatprep.subr.bf16.mxu0 0
    %878 = vmatpush1.bf16.xpose.msra.mxu0 0
    %879 = vmatprep.subr.bf16.mxu0 0
    %880 = vmatpush1.bf16.xpose.msra.mxu0 0
    %881 = vmatprep.subr.bf16.mxu0 0
    %882 = vmatpush1.bf16.xpose.msra.mxu0 0
    %883 = vmatprep.subr.bf16.mxu0 0
    %884 = vmatpush1.bf16.xpose.msra.mxu0 0
    %885 = vmatprep.subr.bf16.mxu0 0
    %886 = vmatpush1.bf16.xpose.msra.mxu0 0
    %887 = vmatprep.subr.bf16.mxu0 0
    %888 = vmatpush1.bf16.xpose.msra.mxu0 0
    %889 = vmatprep.subr.bf16.mxu0 0
    %890 = vmatpush1.bf16.xpose.msra.mxu0 0
    %891 = vmatprep.subr.bf16.mxu0 0
    %892 = vmatpush1.bf16.xpose.msra.mxu0 0
    %893 = vmatprep.subr.bf16.mxu0 0
    %894 = vmatpush1.bf16.xpose.msra.mxu0 0
    %895 = vmatprep.subr.bf16.mxu0 0
    %896 = vmatpush1.bf16.xpose.msra.mxu0 0
    %897 = vmatprep.mubr.bf16.mxu0 0
    %898 = vmatmul.mubr.bf16.gmra.mrb[0].mxu0 %v857
    %v899 = vpop.f32.mrb[0].mxu0
    %v900 = vadd.f32 %v851, %v899
    %v901 = vpop.f32.mrb[0].mxu0
    %v902 = vpop.f32.mrb[0].mxu0
    %v903 = vadd.f32 %v852, %v902
    %v904 = vpop.f32.mrb[0].mxu0
    %905 = vmatprep.mubr.bf16.mxu0 0
    %906 = vmatmul.mubr.bf16.gmra.mrb[0].mxu0 %v860
    %v907 = vpop.f32.mrb[0].mxu0
    %v908 = vadd.f32 %v853, %v907
    %v909 = vpop.f32.mrb[0].mxu0
    %v910 = vpop.f32.mrb[0].mxu0
    %v911 = vadd.f32 %v854, %v910
    %v912 = vpop.f32.mrb[0].mxu0
    %913 = vdwg.mxu0
    %v915 = vsel %vm855, %v417, 0
    %v918 = vsel %vm855, %v420, 0
    %v921 = vsel %vm855, %v634, 0
    %923 = vmatprep.subr.bf16.mxu0 0
    %924 = vmatpush1.bf16.xpose.msra.mxu0 %v921
    %925 = vmatprep.subr.bf16.mxu0 0
    %926 = vmatpush1.bf16.xpose.msra.mxu0 0
    %927 = vmatprep.subr.bf16.mxu0 0
    %928 = vmatpush1.bf16.xpose.msra.mxu0 0
    %929 = vmatprep.subr.bf16.mxu0 0
    %930 = vmatpush1.bf16.xpose.msra.mxu0 0
    %931 = vmatprep.subr.bf16.mxu0 0
    %932 = vmatpush1.bf16.xpose.msra.mxu0 0
    %933 = vmatprep.subr.bf16.mxu0 0
    %934 = vmatpush1.bf16.xpose.msra.mxu0 0
    %935 = vmatprep.subr.bf16.mxu0 0
    %936 = vmatpush1.bf16.xpose.msra.mxu0 0
    %937 = vmatprep.subr.bf16.mxu0 0
    %938 = vmatpush1.bf16.xpose.msra.mxu0 0
    %939 = vmatprep.subr.bf16.mxu0 0
    %940 = vmatpush1.bf16.xpose.msra.mxu0 0
    %941 = vmatprep.subr.bf16.mxu0 0
    %942 = vmatpush1.bf16.xpose.msra.mxu0 0
    %943 = vmatprep.subr.bf16.mxu0 0
    %944 = vmatpush1.bf16.xpose.msra.mxu0 0
    %945 = vmatprep.subr.bf16.mxu0 0
    %946 = vmatpush1.bf16.xpose.msra.mxu0 0
    %947 = vmatprep.subr.bf16.mxu0 0
    %948 = vmatpush1.bf16.xpose.msra.mxu0 0
    %949 = vmatprep.subr.bf16.mxu0 0
    %950 = vmatpush1.bf16.xpose.msra.mxu0 0
    %951 = vmatprep.subr.bf16.mxu0 0
    %952 = vmatpush1.bf16.xpose.msra.mxu0 0
    %953 = vmatprep.subr.bf16.mxu0 0
    %954 = vmatpush1.bf16.xpose.msra.mxu0 0
    %955 = vmatprep.mubr.bf16.mxu0 0
    %956 = vmatmul.mubr.bf16.gmra.mrb[0].mxu0 %v915
    %v957 = vpop.f32.mrb[0].mxu0
    %v958 = vadd.f32 %v851, %v957
    %v959 = vpop.f32.mrb[0].mxu0
    %v960 = vpop.f32.mrb[0].mxu0
    %v961 = vadd.f32 %v852, %v960
    %v962 = vpop.f32.mrb[0].mxu0
    %963 = vmatprep.mubr.bf16.mxu0 0
    %964 = vmatmul.mubr.bf16.gmra.mrb[0].mxu0 %v918
    %v965 = vpop.f32.mrb[0].mxu0
    %v966 = vadd.f32 %v853, %v965
    %v967 = vpop.f32.mrb[0].mxu0
    %v968 = vpop.f32.mrb[0].mxu0
    %v969 = vadd.f32 %v854, %v968
    %v970 = vpop.f32.mrb[0].mxu0
    %971 = vdwg.mxu0
    %vm972 = vcmask 130048
    %v973 = vsel %vm972, %v900, -inf
    %974 = vmax.xlane.f32.xlu0 %v973
    %v975 = vpop.xlane.xlu0 %974
    %v976 = vsel %vm972, %v903, -inf
    %977 = vmax.xlane.f32.xlu0 %v976
    %v978 = vpop.xlane.xlu0 %977
    %v979 = vsel %vm972, %v908, -inf
    %980 = vmax.xlane.f32.xlu0 %v979
    %v981 = vpop.xlane.xlu0 %980
    %v982 = vsel %vm972, %v911, -inf
    %983 = vmax.xlane.f32.xlu0 %v982
    %v984 = vpop.xlane.xlu0 %983
    %v985 = vsel %vm972, %v958, -inf
    %986 = vmax.xlane.f32.xlu0 %v985
    %v987 = vpop.xlane.xlu0 %986
    %v988 = vsel %vm972, %v961, -inf
    %989 = vmax.xlane.f32.xlu0 %v988
    %v990 = vpop.xlane.xlu0 %989
    %v991 = vsel %vm972, %v966, -inf
    %992 = vmax.xlane.f32.xlu0 %v991
    %v993 = vpop.xlane.xlu0 %992
    %v994 = vsel %vm972, %v969, -inf
    %995 = vmax.xlane.f32.xlu0 %v994
    %v996 = vpop.xlane.xlu0 %995
    %v997 = vsub.f32 %v900, %v975
    %v998 = vsub.f32 %v903, %v978
    %v999 = vsub.f32 %v908, %v981
    %v1000 = vsub.f32 %v911, %v984
    %v1001 = vsub.f32 %v958, %v987
    %v1002 = vsub.f32 %v961, %v990
    %v1003 = vsub.f32 %v966, %v993
    %v1004 = vsub.f32 %v969, %v996
    %v1005 = vmul.f32 %v997, 1.442695
    %v1006 = vpow.pop %v1005
    %v1007 = vmul.f32 %v998, 1.442695
    %v1008 = vpow.pop %v1007
    %v1009 = vmul.f32 %v999, 1.442695
    %v1010 = vpow.pop %v1009
    %v1011 = vmul.f32 %v1000, 1.442695
    %v1012 = vpow.pop %v1011
    %v1013 = vmul.f32 %v1001, 1.442695
    %v1014 = vpow.pop %v1013
    %v1015 = vmul.f32 %v1002, 1.442695
    %v1016 = vpow.pop %v1015
    %v1017 = vmul.f32 %v1003, 1.442695
    %v1018 = vpow.pop %v1017
    %v1019 = vmul.f32 %v1004, 1.442695
    %v1020 = vpow.pop %v1019
    %v1021 = vsel %vm972, %v1006, 0.0
    %1022 = vadd.xlane.f32.xlu0 %v1021
    %v1023 = vpop.xlane.xlu0 %1022
    %v1024 = vsel %vm972, %v1008, 0.0
    %1025 = vadd.xlane.f32.xlu0 %v1024
    %v1026 = vpop.xlane.xlu0 %1025
    %v1027 = vsel %vm972, %v1010, 0.0
    %1028 = vadd.xlane.f32.xlu0 %v1027
    %v1029 = vpop.xlane.xlu0 %1028
    %v1030 = vsel %vm972, %v1012, 0.0
    %1031 = vadd.xlane.f32.xlu0 %v1030
    %v1032 = vpop.xlane.xlu0 %1031
    %v1033 = vsel %vm972, %v1014, 0.0
    %1034 = vadd.xlane.f32.xlu0 %v1033
    %v1035 = vpop.xlane.xlu0 %1034
    %v1036 = vsel %vm972, %v1016, 0.0
    %1037 = vadd.xlane.f32.xlu0 %v1036
    %v1038 = vpop.xlane.xlu0 %1037
    %v1039 = vsel %vm972, %v1018, 0.0
    %1040 = vadd.xlane.f32.xlu0 %v1039
    %v1041 = vpop.xlane.xlu0 %1040
    %v1042 = vsel %vm972, %v1020, 0.0
    %1043 = vadd.xlane.f32.xlu0 %v1042
    %v1044 = vpop.xlane.xlu0 %1043
    %v1045 = vrcp.pop %v1023
    %v1046 = vrcp.pop %v1026
    %v1047 = vrcp.pop %v1029
    %v1048 = vrcp.pop %v1032
    %v1049 = vrcp.pop %v1035
    %v1050 = vrcp.pop %v1038
    %v1051 = vrcp.pop %v1041
    %v1052 = vrcp.pop %v1044
    %v1053 = vmul.f32 %v1006, %v1045
    %v1054 = vmul.f32 %v1008, %v1046
    %v1055 = vmul.f32 %v1010, %v1047
    %v1056 = vmul.f32 %v1012, %v1048
    %v1057 = vmul.f32 %v1014, %v1049
    %v1058 = vmul.f32 %v1016, %v1050
    %v1059 = vmul.f32 %v1018, %v1051
    %v1060 = vmul.f32 %v1020, %v1052
    %v1061 = vpack.c.bf16 %v1054, %v1053
    %v1062 = vpack.c.bf16 %v1056, %v1055
    %v1063 = vpack.c.bf16 %v1058, %v1057
    %v1064 = vpack.c.bf16 %v1060, %v1059
    %v1066 = vsel %vm972, %v1061, 0
    %v1069 = vsel %vm972, %v1062, 0
    %1071 = vmatprep.subr.bf16.mxu0 0
    %1072 = vmatpush1.bf16.msra.mxu0 %v845
    %1073 = vmatprep.subr.bf16.mxu0 0
    %1074 = vmatpush1.bf16.msra.mxu0 0
    %1075 = vmatprep.subr.bf16.mxu0 0
    %1076 = vmatpush1.bf16.msra.mxu0 0
    %1077 = vmatprep.subr.bf16.mxu0 0
    %1078 = vmatpush1.bf16.msra.mxu0 0
    %1079 = vmatprep.subr.bf16.mxu0 0
    %1080 = vmatpush1.bf16.msra.mxu0 0
    %1081 = vmatprep.subr.bf16.mxu0 0
    %1082 = vmatpush1.bf16.msra.mxu0 0
    %1083 = vmatprep.subr.bf16.mxu0 0
    %1084 = vmatpush1.bf16.msra.mxu0 0
    %1085 = vmatprep.subr.bf16.mxu0 0
    %1086 = vmatpush1.bf16.msra.mxu0 0
    %1087 = vmatprep.subr.bf16.mxu0 0
    %1088 = vmatpush1.bf16.msra.mxu0 0
    %1089 = vmatprep.subr.bf16.mxu0 0
    %1090 = vmatpush1.bf16.msra.mxu0 0
    %1091 = vmatprep.subr.bf16.mxu0 0
    %1092 = vmatpush1.bf16.msra.mxu0 0
    %1093 = vmatprep.subr.bf16.mxu0 0
    %1094 = vmatpush1.bf16.msra.mxu0 0
    %1095 = vmatprep.subr.bf16.mxu0 0
    %1096 = vmatpush1.bf16.msra.mxu0 0
    %1097 = vmatprep.subr.bf16.mxu0 0
    %1098 = vmatpush1.bf16.msra.mxu0 0
    %1099 = vmatprep.subr.bf16.mxu0 0
    %1100 = vmatpush1.bf16.msra.mxu0 0
    %1101 = vmatprep.subr.bf16.mxu0 0
    %1102 = vmatpush1.bf16.msra.mxu0 0
    %1103 = vmatprep.mubr.bf16.mxu0 0
    %1104 = vmatmul.mubr.bf16.gmra.mrb[0].mxu0 %v1066
    %v1105 = vpop.f32.mrb[0].mxu0
    %v1106 = vadd.f32 0.0, %v1105
    %v1107 = vpop.f32.mrb[0].mxu0
    %v1108 = vpop.f32.mrb[0].mxu0
    %v1109 = vadd.f32 0.0, %v1108
    %v1110 = vpop.f32.mrb[0].mxu0
    %1111 = vmatprep.mubr.bf16.mxu0 0
    %1112 = vmatmul.mubr.bf16.gmra.mrb[0].mxu0 %v1069
    %v1113 = vpop.f32.mrb[0].mxu0
    %v1114 = vadd.f32 0.0, %v1113
    %v1115 = vpop.f32.mrb[0].mxu0
    %v1116 = vpop.f32.mrb[0].mxu0
    %v1117 = vadd.f32 0.0, %v1116
    %v1118 = vpop.f32.mrb[0].mxu0
    %1119 = vdwg.mxu0
    %v1121 = vsel %vm972, %v1063, 0
    %v1124 = vsel %vm972, %v1064, 0
    %1126 = vmatprep.subr.bf16.mxu0 0
    %1127 = vmatpush1.bf16.msra.mxu0 %v849
    %1128 = vmatprep.subr.bf16.mxu0 0
    %1129 = vmatpush1.bf16.msra.mxu0 0
    %1130 = vmatprep.subr.bf16.mxu0 0
    %1131 = vmatpush1.bf16.msra.mxu0 0
    %1132 = vmatprep.subr.bf16.mxu0 0
    %1133 = vmatpush1.bf16.msra.mxu0 0
    %1134 = vmatprep.subr.bf16.mxu0 0
    %1135 = vmatpush1.bf16.msra.mxu0 0
    %1136 = vmatprep.subr.bf16.mxu0 0
    %1137 = vmatpush1.bf16.msra.mxu0 0
    %1138 = vmatprep.subr.bf16.mxu0 0
    %1139 = vmatpush1.bf16.msra.mxu0 0
    %1140 = vmatprep.subr.bf16.mxu0 0
    %1141 = vmatpush1.bf16.msra.mxu0 0
    %1142 = vmatprep.subr.bf16.mxu0 0
    %1143 = vmatpush1.bf16.msra.mxu0 0
    %1144 = vmatprep.subr.bf16.mxu0 0
    %1145 = vmatpush1.bf16.msra.mxu0 0
    %1146 = vmatprep.subr.bf16.mxu0 0
    %1147 = vmatpush1.bf16.msra.mxu0 0
    %1148 = vmatprep.subr.bf16.mxu0 0
    %1149 = vmatpush1.bf16.msra.mxu0 0
    %1150 = vmatprep.subr.bf16.mxu0 0
    %1151 = vmatpush1.bf16.msra.mxu0 0
    %1152 = vmatprep.subr.bf16.mxu0 0
    %1153 = vmatpush1.bf16.msra.mxu0 0
    %1154 = vmatprep.subr.bf16.mxu0 0
    %1155 = vmatpush1.bf16.msra.mxu0 0
    %1156 = vmatprep.subr.bf16.mxu0 0
    %1157 = vmatpush1.bf16.msra.mxu0 0
    %1158 = vmatprep.mubr.bf16.mxu0 0
    %1159 = vmatmul.mubr.bf16.gmra.mrb[0].mxu0 %v1121
    %v1160 = vpop.f32.mrb[0].mxu0
    %v1161 = vadd.f32 0.0, %v1160
    %v1162 = vpop.f32.mrb[0].mxu0
    %v1163 = vpop.f32.mrb[0].mxu0
    %v1164 = vadd.f32 0.0, %v1163
    %v1165 = vpop.f32.mrb[0].mxu0
    %1166 = vmatprep.mubr.bf16.mxu0 0
    %1167 = vmatmul.mubr.bf16.gmra.mrb[0].mxu0 %v1124
    %v1168 = vpop.f32.mrb[0].mxu0
    %v1169 = vadd.f32 0.0, %v1168
    %v1170 = vpop.f32.mrb[0].mxu0
    %v1171 = vpop.f32.mrb[0].mxu0
    %v1172 = vadd.f32 0.0, %v1171
    %v1173 = vpop.f32.mrb[0].mxu0
    %1174 = vdwg.mxu0
    %v1175 = vpack.c.bf16 %v1109, %v1106
    %v1176 = vpack.c.bf16 %v1117, %v1114
    %v1177 = vpack.c.bf16 %v1164, %v1161
    %v1178 = vpack.c.bf16 %v1172, %v1169
    %v1179 = vld [vmem:[%s2] sm:$0xf]
    %v1180 = vld [vmem:[%s2 + $0x4] sm:$0xf]
    %v1181 = vld [vmem:[%s2 + $0x8] sm:$0xf]
    %v1182 = vld [vmem:[%s2 + $0xc] sm:$0xf]
    %v1184 = vsel %vm855, %v1175, 0
    %vm1186 = vcmask 1043456
    %v1188 = vsel %vm1186, %v1179, 0
    %1190 = vmatprep.subr.bf16.mxu0 0
    %1191 = vmatpush1.bf16.msra.mxu0 %v1188
    %1192 = vmatprep.subr.bf16.mxu0 0
    %1193 = vmatpush1.bf16.msra.mxu0 0
    %1194 = vmatprep.subr.bf16.mxu0 0
    %1195 = vmatpush1.bf16.msra.mxu0 0
    %1196 = vmatprep.subr.bf16.mxu0 0
    %1197 = vmatpush1.bf16.msra.mxu0 0
    %1198 = vmatprep.subr.bf16.mxu0 0
    %1199 = vmatpush1.bf16.msra.mxu0 0
    %1200 = vmatprep.subr.bf16.mxu0 0
    %1201 = vmatpush1.bf16.msra.mxu0 0
    %1202 = vmatprep.subr.bf16.mxu0 0
    %1203 = vmatpush1.bf16.msra.mxu0 0
    %1204 = vmatprep.subr.bf16.mxu0 0
    %1205 = vmatpush1.bf16.msra.mxu0 0
    %1206 = vmatprep.subr.bf16.mxu0 0
    %1207 = vmatpush1.bf16.msra.mxu0 0
    %1208 = vmatprep.subr.bf16.mxu0 0
    %1209 = vmatpush1.bf16.msra.mxu0 0
    %1210 = vmatprep.subr.bf16.mxu0 0
    %1211 = vmatpush1.bf16.msra.mxu0 0
    %1212 = vmatprep.subr.bf16.mxu0 0
    %1213 = vmatpush1.bf16.msra.mxu0 0
    %1214 = vmatprep.subr.bf16.mxu0 0
    %1215 = vmatpush1.bf16.msra.mxu0 0
    %1216 = vmatprep.subr.bf16.mxu0 0
    %1217 = vmatpush1.bf16.msra.mxu0 0
    %1218 = vmatprep.subr.bf16.mxu0 0
    %1219 = vmatpush1.bf16.msra.mxu0 0
    %1220 = vmatprep.subr.bf16.mxu0 0
    %1221 = vmatpush1.bf16.msra.mxu0 0
    %1222 = vmatprep.mubr.bf16.mxu0 0
    %1223 = vmatmul.mubr.bf16.gmra.mrb[0].mxu0 %v1184
    %v1224 = vpop.f32.mrb[0].mxu0
    %v1225 = vadd.f32 0.0, %v1224
    %v1226 = vpop.f32.mrb[0].mxu0
    %v1227 = vpop.f32.mrb[0].mxu0
    %v1228 = vadd.f32 0.0, %v1227
    %v1229 = vpop.f32.mrb[0].mxu0
    %1230 = vdwg.mxu0
    %v1232 = vsel %vm855, %v1176, 0
    %v1235 = vsel %vm1186, %v1180, 0
    %1237 = vmatprep.subr.bf16.mxu0 0
    %1238 = vmatpush1.bf16.msra.mxu0 %v1235
    %1239 = vmatprep.subr.bf16.mxu0 0
    %1240 = vmatpush1.bf16.msra.mxu0 0
    %1241 = vmatprep.subr.bf16.mxu0 0
    %1242 = vmatpush1.bf16.msra.mxu0 0
    %1243 = vmatprep.subr.bf16.mxu0 0
    %1244 = vmatpush1.bf16.msra.mxu0 0
    %1245 = vmatprep.subr.bf16.mxu0 0
    %1246 = vmatpush1.bf16.msra.mxu0 0
    %1247 = vmatprep.subr.bf16.mxu0 0
    %1248 = vmatpush1.bf16.msra.mxu0 0
    %1249 = vmatprep.subr.bf16.mxu0 0
    %1250 = vmatpush1.bf16.msra.mxu0 0
    %1251 = vmatprep.subr.bf16.mxu0 0
    %1252 = vmatpush1.bf16.msra.mxu0 0
    %1253 = vmatprep.subr.bf16.mxu0 0
    %1254 = vmatpush1.bf16.msra.mxu0 0
    %1255 = vmatprep.subr.bf16.mxu0 0
    %1256 = vmatpush1.bf16.msra.mxu0 0
    %1257 = vmatprep.subr.bf16.mxu0 0
    %1258 = vmatpush1.bf16.msra.mxu0 0
    %1259 = vmatprep.subr.bf16.mxu0 0
    %1260 = vmatpush1.bf16.msra.mxu0 0
    %1261 = vmatprep.subr.bf16.mxu0 0
    %1262 = vmatpush1.bf16.msra.mxu0 0
    %1263 = vmatprep.subr.bf16.mxu0 0
    %1264 = vmatpush1.bf16.msra.mxu0 0
    %1265 = vmatprep.subr.bf16.mxu0 0
    %1266 = vmatpush1.bf16.msra.mxu0 0
    %1267 = vmatprep.subr.bf16.mxu0 0
    %1268 = vmatpush1.bf16.msra.mxu0 0
    %1269 = vmatprep.mubr.bf16.mxu0 0
    %1270 = vmatmul.mubr.bf16.gmra.mrb[0].mxu0 %v1232
    %v1271 = vpop.f32.mrb[0].mxu0
    %v1272 = vadd.f32 0.0, %v1271
    %v1273 = vpop.f32.mrb[0].mxu0
    %v1274 = vpop.f32.mrb[0].mxu0
    %v1275 = vadd.f32 0.0, %v1274
    %v1276 = vpop.f32.mrb[0].mxu0
    %1277 = vdwg.mxu0
    %v1279 = vsel %vm855, %v1177, 0
    %v1282 = vsel %vm1186, %v1181, 0
    %1284 = vmatprep.subr.bf16.mxu0 0
    %1285 = vmatpush1.bf16.msra.mxu0 %v1282
    %1286 = vmatprep.subr.bf16.mxu0 0
    %1287 = vmatpush1.bf16.msra.mxu0 0
    %1288 = vmatprep.subr.bf16.mxu0 0
    %1289 = vmatpush1.bf16.msra.mxu0 0
    %1290 = vmatprep.subr.bf16.mxu0 0
    %1291 = vmatpush1.bf16.msra.mxu0 0
    %1292 = vmatprep.subr.bf16.mxu0 0
    %1293 = vmatpush1.bf16.msra.mxu0 0
    %1294 = vmatprep.subr.bf16.mxu0 0
    %1295 = vmatpush1.bf16.msra.mxu0 0
    %1296 = vmatprep.subr.bf16.mxu0 0
    %1297 = vmatpush1.bf16.msra.mxu0 0
    %1298 = vmatprep.subr.bf16.mxu0 0
    %1299 = vmatpush1.bf16.msra.mxu0 0
    %1300 = vmatprep.subr.bf16.mxu0 0
    %1301 = vmatpush1.bf16.msra.mxu0 0
    %1302 = vmatprep.subr.bf16.mxu0 0
    %1303 = vmatpush1.bf16.msra.mxu0 0
    %1304 = vmatprep.subr.bf16.mxu0 0
    %1305 = vmatpush1.bf16.msra.mxu0 0
    %1306 = vmatprep.subr.bf16.mxu0 0
    %1307 = vmatpush1.bf16.msra.mxu0 0
    %1308 = vmatprep.subr.bf16.mxu0 0
    %1309 = vmatpush1.bf16.msra.mxu0 0
    %1310 = vmatprep.subr.bf16.mxu0 0
    %1311 = vmatpush1.bf16.msra.mxu0 0
    %1312 = vmatprep.subr.bf16.mxu0 0
    %1313 = vmatpush1.bf16.msra.mxu0 0
    %1314 = vmatprep.subr.bf16.mxu0 0
    %1315 = vmatpush1.bf16.msra.mxu0 0
    %1316 = vmatprep.mubr.bf16.mxu0 0
    %1317 = vmatmul.mubr.bf16.gmra.mrb[0].mxu0 %v1279
    %v1318 = vpop.f32.mrb[0].mxu0
    %v1319 = vadd.f32 0.0, %v1318
    %v1320 = vpop.f32.mrb[0].mxu0
    %v1321 = vpop.f32.mrb[0].mxu0
    %v1322 = vadd.f32 0.0, %v1321
    %v1323 = vpop.f32.mrb[0].mxu0
    %1324 = vdwg.mxu0
    %v1326 = vsel %vm855, %v1178, 0
    %v1329 = vsel %vm1186, %v1182, 0
    %1331 = vmatprep.subr.bf16.mxu0 0
    %1332 = vmatpush1.bf16.msra.mxu0 %v1329
    %1333 = vmatprep.subr.bf16.mxu0 0
    %1334 = vmatpush1.bf16.msra.mxu0 0
    %1335 = vmatprep.subr.bf16.mxu0 0
    %1336 = vmatpush1.bf16.msra.mxu0 0
    %1337 = vmatprep.subr.bf16.mxu0 0
    %1338 = vmatpush1.bf16.msra.mxu0 0
    %1339 = vmatprep.subr.bf16.mxu0 0
    %1340 = vmatpush1.bf16.msra.mxu0 0
    %1341 = vmatprep.subr.bf16.mxu0 0
    %1342 = vmatpush1.bf16.msra.mxu0 0
    %1343 = vmatprep.subr.bf16.mxu0 0
    %1344 = vmatpush1.bf16.msra.mxu0 0
    %1345 = vmatprep.subr.bf16.mxu0 0
    %1346 = vmatpush1.bf16.msra.mxu0 0
    %1347 = vmatprep.subr.bf16.mxu0 0
    %1348 = vmatpush1.bf16.msra.mxu0 0
    %1349 = vmatprep.subr.bf16.mxu0 0
    %1350 = vmatpush1.bf16.msra.mxu0 0
    %1351 = vmatprep.subr.bf16.mxu0 0
    %1352 = vmatpush1.bf16.msra.mxu0 0
    %1353 = vmatprep.subr.bf16.mxu0 0
    %1354 = vmatpush1.bf16.msra.mxu0 0
    %1355 = vmatprep.subr.bf16.mxu0 0
    %1356 = vmatpush1.bf16.msra.mxu0 0
    %1357 = vmatprep.subr.bf16.mxu0 0
    %1358 = vmatpush1.bf16.msra.mxu0 0
    %1359 = vmatprep.subr.bf16.mxu0 0
    %1360 = vmatpush1.bf16.msra.mxu0 0
    %1361 = vmatprep.subr.bf16.mxu0 0
    %1362 = vmatpush1.bf16.msra.mxu0 0
    %1363 = vmatprep.mubr.bf16.mxu0 0
    %1364 = vmatmul.mubr.bf16.gmra.mrb[0].mxu0 %v1326
    %v1365 = vpop.f32.mrb[0].mxu0
    %v1366 = vadd.f32 0.0, %v1365
    %v1367 = vpop.f32.mrb[0].mxu0
    %v1368 = vpop.f32.mrb[0].mxu0
    %v1369 = vadd.f32 0.0, %v1368
    %v1370 = vpop.f32.mrb[0].mxu0
    %1371 = vdwg.mxu0
    %v1372 = vsel %vm76, %v1225, 0.0
    %v1373 = vsel %vm76, %v1272, 0.0
    %v1374 = vadd.f32 %v1372, %v1373
    %v1375 = vsel %vm76, %v1319, 0.0
    %v1376 = vadd.f32 %v1374, %v1375
    %v1377 = vsel %vm76, %v1366, 0.0
    %v1378 = vadd.f32 %v1376, %v1377
    %v1379 = vsel %vm76, %v1228, 0.0
    %v1380 = vsel %vm76, %v1275, 0.0
    %v1381 = vadd.f32 %v1379, %v1380
    %v1382 = vsel %vm76, %v1322, 0.0
    %v1383 = vadd.f32 %v1381, %v1382
    %v1384 = vsel %vm76, %v1369, 0.0
    %v1385 = vadd.f32 %v1383, %v1384
    %1386 = vst.msk [vmem:[#allocation7] sm:$0xff] %vm76, %v1378
    %1387 = vst.msk [vmem:[#allocation7 + $0x8] sm:$0xff] %vm76, %v1385
    // Predicated region
    $region34: #{tpu_custom_call.1} parent=1 // pred_check
      _
    $region35: #{tpu_custom_call.1} parent=1 // pred_check_branch
      %1389 = sbr.rel (0) target = $region37
    $region36: #{tpu_custom_call.1} parent=1 // pred_region
      %s1391 = ssub.s32 256, 256
      %1392 = vsyncadd [#allocation4], %s1391
      %s1393 = sshll.u32 [#allocation7], 4
      %s1394 = int_to_ptr.vmem [resolvable:$true] %s1393
      %1399 = dma.vmem_to_hbm [thread:$0]  %s1394, 256, %s6, [#allocation4], 128, 128, 8
    $region37: #{tpu_custom_call.1} parent=1 // pred_fallthru
      _
    // Predicated region
    $region38: #{tpu_custom_call.1} parent=1 // pred_check
      _
    $region39: #{tpu_custom_call.1} parent=1 // pred_check_branch
      %1401 = sbr.rel (0) target = $region41
    $region40: #{tpu_custom_call.1} parent=1 // pred_region
      %1402 = dma.done [#allocation4], 256
    $region41: #{tpu_custom_call.1} parent=1 // pred_fallthru
      _
    %1403 = vsyncpa [#allocation3], 1
    %1404 = vsyncpa [#allocation6], 1
    %1405 = vsyncpa [#allocation4], 1

// kernel: tpu_custom_call.1
$region0: #{tpu_custom_call.1}
  #allocation0 [shape = 'u32[]', space=smem, size = 0x4, offset = 0x4, fixed_abs, tag = 'smem constant byte address 0x4 - core index']
  #allocation1 [shape = 'u32[144,128]{1,0:T(1,128)}', space=vmem, size = 0x12000, scoped, tag = 'internal scratch']
  %s0 = inlined_call_operand.hbm [shape: bf16[16,32], index: 0, kind: input, shape index: {}]
  %s1 = inlined_call_operand.vmem [shape: bf16[32,128], index: 1, kind: input, shape index: {}]
  %s2 = inlined_call_operand.vmem [shape: bf16[4,8,32], index: 2, kind: input, shape index: {}]
  %s3 = inlined_call_operand.vmem [shape: f32[16,64], index: 3, kind: input, shape index: {}]
  %s4 = inlined_call_operand.hbm [shape: f32[16,64], index: 4, kind: input, shape index: {}]
  %s5 = inlined_call_operand.vmem [shape: f32[32,16], index: 5, kind: input, shape index: {}]
  %s6 = inlined_call_operand.hbm [shape: f32[16,32], index: 6, kind: output, shape index: {}]
  %s7 = sld [smem:[#allocation0]]
  $region42: #{tpu_custom_call.1} parent=0
    _
  %s9 = ssub.s32 1, %s7
  %s10 = scalar_select 0, %s9, %s7
  $region1: #{tpu_custom_call.1} parent=0
    #allocation2 [shape = 'u8[4096]{0}', space=vmem, size = 0x1000, scoped, tag = 'input window, operand 0, single buffered']
    #allocation3 [shape = 's32[1]{0}', space=sflag, size = 0x4, scoped, tag = 'scoped memory for tpu_custom_call.1']
    #allocation4 [shape = 's32[1]{0}', space=sflag, size = 0x4, scoped, tag = 'scoped memory for tpu_custom_call.1']
    #allocation5 [shape = 'u8[8192]{0}', space=vmem, size = 0x2000, scoped, tag = 'input window, operand 4, single buffered']
    #allocation6 [shape = 's32[1]{0}', space=sflag, size = 0x4, scoped, tag = 'scoped memory for tpu_custom_call.1']
    #allocation7 [shape = 'u8[8192]{0}', space=vmem, size = 0x2000, scoped, tag = 'output window, operand 0, single buffered']
    %11 = vsyncpa [#allocation3], 0
    %12 = vsyncpa [#allocation6], 0
    %13 = vsyncpa [#allocation4], 0
    // Predicated region
    $region2: #{tpu_custom_call.1} parent=1 // pred_check
      _
    $region3: #{tpu_custom_call.1} parent=1 // pred_check_branch
      %15 = sbr.rel (0) target = $region5
    $region4: #{tpu_custom_call.1} parent=1 // pred_region
      %s17 = ssub.s32 128, 128
      %18 = vsyncadd [#allocation3], %s17
      %s19 = sshll.u32 [#allocation2], 4
      %s20 = int_to_ptr.vmem [resolvable:$true] %s19
      %25 = dma.hbm_to_vmem [thread:$0]  %s0, 128, %s20, [#allocation3], 64, 64, 4
    $region5: #{tpu_custom_call.1} parent=1 // pred_fallthru
      _
    // Predicated region
    $region6: #{tpu_custom_call.1} parent=1 // pred_check
      _
    $region7: #{tpu_custom_call.1} parent=1 // pred_check_branch
      %27 = sbr.rel (0) target = $region9
    $region8: #{tpu_custom_call.1} parent=1 // pred_region
      _
    $region9: #{tpu_custom_call.1} parent=1 // pred_fallthru
      _
    // Predicated region
    $region10: #{tpu_custom_call.1} parent=1 // pred_check
      _
    $region11: #{tpu_custom_call.1} parent=1 // pred_check_branch
      %29 = sbr.rel (0) target = $region13
    $region12: #{tpu_custom_call.1} parent=1 // pred_region
      _
    $region13: #{tpu_custom_call.1} parent=1 // pred_fallthru
      _
    // Predicated region
    $region14: #{tpu_custom_call.1} parent=1 // pred_check
      _
    $region15: #{tpu_custom_call.1} parent=1 // pred_check_branch
      %31 = sbr.rel (0) target = $region17
    $region16: #{tpu_custom_call.1} parent=1 // pred_region
      _
    $region17: #{tpu_custom_call.1} parent=1 // pred_fallthru
      _
    // Predicated region
    $region18: #{tpu_custom_call.1} parent=1 // pred_check
      _
    $region19: #{tpu_custom_call.1} parent=1 // pred_check_branch
      %33 = sbr.rel (0) target = $region21
    $region20: #{tpu_custom_call.1} parent=1 // pred_region
      %s35 = ssub.s32 256, 256
      %36 = vsyncadd [#allocation6], %s35
      %s37 = sshll.u32 [#allocation5], 4
      %s38 = int_to_ptr.vmem [resolvable:$true] %s37
      %43 = dma.hbm_to_vmem [thread:$0]  %s4, 256, %s38, [#allocation6], 128, 128, 8
    $region21: #{tpu_custom_call.1} parent=1 // pred_fallthru
      _
    // Predicated region
    $region22: #{tpu_custom_call.1} parent=1 // pred_check
      _
    $region23: #{tpu_custom_call.1} parent=1 // pred_check_branch
      %45 = sbr.rel (0) target = $region25
    $region24: #{tpu_custom_call.1} parent=1 // pred_region
      _
    $region25: #{tpu_custom_call.1} parent=1 // pred_fallthru
      _
    // Predicated region
    $region26: #{tpu_custom_call.1} parent=1 // pred_check
      _
    $region27: #{tpu_custom_call.1} parent=1 // pred_check_branch
      %47 = sbr.rel (0) target = $region29
    $region28: #{tpu_custom_call.1} parent=1 // pred_region
      %48 = dma.done [#allocation3], 128
    $region29: #{tpu_custom_call.1} parent=1 // pred_fallthru
      _
    // Predicated region
    $region30: #{tpu_custom_call.1} parent=1 // pred_check
      _
    $region31: #{tpu_custom_call.1} parent=1 // pred_check_branch
      %50 = sbr.rel (0) target = $region33
    $region32: #{tpu_custom_call.1} parent=1 // pred_region
      %51 = dma.done [#allocation6], 256
    $region33: #{tpu_custom_call.1} parent=1 // pred_fallthru
      _
    %v53 = vld [vmem:[#allocation2] sm:$0xf]
    %v54 = vld [vmem:[#allocation2 + $0x4] sm:$0xf]
    %v55 = vld [vmem:[%s1] sm:$0xf]
    %v56 = vld [vmem:[%s1 + $0x4] sm:$0xf]
    %v57 = vld [vmem:[%s1 + $0x8] sm:$0xf]
    %v58 = vld [vmem:[%s1 + $0xc] sm:$0xf]
    %v61 = vunpack.c.l.b16 %v53
    %v62 = vunpack.c.l.b16 %v54
    %v63 = vpack.c.b16 %v62, %v61
    %v68 = vunpack.c.l.b16 %v55
    %v69 = vunpack.c.l.b16 %v56
    %v70 = vunpack.c.l.b16 %v57
    %v71 = vunpack.c.l.b16 %v58
    %v72 = vpack.c.b16 %v69, %v68
    %v73 = vpack.c.b16 %v71, %v70
    %vm76 = vcmask 261120
    %v78 = vsel %vm76, %v63, 0
    %80 = vmatprep.subr.bf16.mxu0 0
    %81 = vmatpush1.bf16.msra.mxu0 %v72
    %82 = vmatprep.subr.bf16.mxu0 0
    %83 = vmatpush1.bf16.msra.mxu0 %v73
    %84 = vmatprep.subr.bf16.mxu0 0
    %85 = vmatpush1.bf16.msra.mxu0 0
    %86 = vmatprep.subr.bf16.mxu0 0
    %87 = vmatpush1.bf16.msra.mxu0 0
    %88 = vmatprep.subr.bf16.mxu0 0
    %89 = vmatpush1.bf16.msra.mxu0 0
    %90 = vmatprep.subr.bf16.mxu0 0
    %91 = vmatpush1.bf16.msra.mxu0 0
    %92 = vmatprep.subr.bf16.mxu0 0
    %93 = vmatpush1.bf16.msra.mxu0 0
    %94 = vmatprep.subr.bf16.mxu0 0
    %95 = vmatpush1.bf16.msra.mxu0 0
    %96 = vmatprep.subr.bf16.mxu0 0
    %97 = vmatpush1.bf16.msra.mxu0 0
    %98 = vmatprep.subr.bf16.mxu0 0
    %99 = vmatpush1.bf16.msra.mxu0 0
    %100 = vmatprep.subr.bf16.mxu0 0
    %101 = vmatpush1.bf16.msra.mxu0 0
    %102 = vmatprep.subr.bf16.mxu0 0
    %103 = vmatpush1.bf16.msra.mxu0 0
    %104 = vmatprep.subr.bf16.mxu0 0
    %105 = vmatpush1.bf16.msra.mxu0 0
    %106 = vmatprep.subr.bf16.mxu0 0
    %107 = vmatpush1.bf16.msra.mxu0 0
    %108 = vmatprep.subr.bf16.mxu0 0
    %109 = vmatpush1.bf16.msra.mxu0 0
    %110 = vmatprep.subr.bf16.mxu0 0
    %111 = vmatpush1.bf16.msra.mxu0 0
    %112 = vmatprep.mubr.bf16.mxu0 0
    %113 = vmatmul.mubr.bf16.gmra.mrb[0].mxu0 %v78
    %v114 = vpop.f32.mrb[0].mxu0
    %v115 = vadd.f32 0.0, %v114
    %v116 = vpop.f32.mrb[0].mxu0
    %v117 = vpop.f32.mrb[0].mxu0
    %v118 = vadd.f32 0.0, %v117
    %v119 = vpop.f32.mrb[0].mxu0
    %120 = vdwg.mxu0
    %v121 = vld [vmem:[%s3] sm:$0xff]
    %v122 = vld [vmem:[%s3 + $0x8] sm:$0xff]
    %v123 = vmul.f32 %v115, %v121
    %v124 = vmul.f32 %v118, %v122
    %v125 = vld [vmem:[#allocation5] sm:$0xff]
    %v126 = vld [vmem:[#allocation5 + $0x8] sm:$0xff]
    %129 = vrot.lane.b32.xlu0 %v125, 64
    %v130 = vpop.permute.xlu0 %129
    %131 = vrot.lane.b32.xlu0 %v126, 64
    %v132 = vpop.permute.xlu0 %131
    %v135 = vmul.f32 %v115, %v130
    %v136 = vmul.f32 %v118, %v132
    %139 = vrot.lane.b32.xlu0 %v135, 64
    %v140 = vpop.permute.xlu0 %139
    %141 = vrot.lane.b32.xlu0 %v136, 64
    %v142 = vpop.permute.xlu0 %141
    %v145 = vadd.f32 %v123, %v140
    %v146 = vadd.f32 %v124, %v142
    %v147 = vpack.c.bf16 %v146, %v145
    %149 = vrot.lane.b32.xlu0 %v147, 120
    %v150 = vpop.permute.xlu0 %149
    %151 = vrot.lane.b32.xlu0 %v147, 112
    %v152 = vpop.permute.xlu0 %151
    %153 = vrot.lane.b32.xlu0 %v147, 104
    %v154 = vpop.permute.xlu0 %153
    %v155 = vld [vmem:[%s5] sm:$0xff]
    %v156 = vld [vmem:[%s5 + $0x8] sm:$0xff]
    %v157 = vld [vmem:[%s5 + $0x10] sm:$0xff]
    %v158 = vld [vmem:[%s5 + $0x18] sm:$0xff]
    %159 = vrot.lane.b32.xlu0 %v147, 96
    %v160 = vpop.permute.xlu0 %159
    %vm161 = vcmask 64512
    %v163 = vsel %vm161, %v147, 0
    %v166 = vsel %vm161, %v150, 0
    %v169 = vsel %vm161, %v160, 0
    %171 = vmatprep.subr.bf16.mxu0 0
    %172 = vmatpush1.bf16.xpose.msra.mxu0 %v169
    %173 = vmatprep.subr.bf16.mxu0 0
    %174 = vmatpush1.bf16.xpose.msra.mxu0 0
    %175 = vmatprep.subr.bf16.mxu0 0
    %176 = vmatpush1.bf16.xpose.msra.mxu0 0
    %177 = vmatprep.subr.bf16.mxu0 0
    %178 = vmatpush1.bf16.xpose.msra.mxu0 0
    %179 = vmatprep.subr.bf16.mxu0 0
    %180 = vmatpush1.bf16.xpose.msra.mxu0 0
    %181 = vmatprep.subr.bf16.mxu0 0
    %182 = vmatpush1.bf16.xpose.msra.mxu0 0
    %183 = vmatprep.subr.bf16.mxu0 0
    %184 = vmatpush1.bf16.xpose.msra.mxu0 0
    %185 = vmatprep.subr.bf16.mxu0 0
    %186 = vmatpush1.bf16.xpose.msra.mxu0 0
    %187 = vmatprep.subr.bf16.mxu0 0
    %188 = vmatpush1.bf16.xpose.msra.mxu0 0
    %189 = vmatprep.subr.bf16.mxu0 0
    %190 = vmatpush1.bf16.xpose.msra.mxu0 0
    %191 = vmatprep.subr.bf16.mxu0 0
    %192 = vmatpush1.bf16.xpose.msra.mxu0 0
    %193 = vmatprep.subr.bf16.mxu0 0
    %194 = vmatpush1.bf16.xpose.msra.mxu0 0
    %195 = vmatprep.subr.bf16.mxu0 0
    %196 = vmatpush1.bf16.xpose.msra.mxu0 0
    %197 = vmatprep.subr.bf16.mxu0 0
    %198 = vmatpush1.bf16.xpose.msra.mxu0 0
    %199 = vmatprep.subr.bf16.mxu0 0
    %200 = vmatpush1.bf16.xpose.msra.mxu0 0
    %201 = vmatprep.subr.bf16.mxu0 0
    %202 = vmatpush1.bf16.xpose.msra.mxu0 0
    %203 = vmatprep.mubr.bf16.mxu0 0
    %204 = vmatmul.mubr.bf16.gmra.mrb[0].mxu0 %v163
    %v205 = vpop.f32.mrb[0].mxu0
    %v206 = vadd.f32 %v155, %v205
    %v207 = vpop.f32.mrb[0].mxu0
    %v208 = vpop.f32.mrb[0].mxu0
    %v209 = vadd.f32 %v156, %v208
    %v210 = vpop.f32.mrb[0].mxu0
    %211 = vmatprep.mubr.bf16.mxu0 0
    %212 = vmatmul.mubr.bf16.gmra.mrb[0].mxu0 %v166
    %v213 = vpop.f32.mrb[0].mxu0
    %v214 = vadd.f32 %v157, %v213
    %v215 = vpop.f32.mrb[0].mxu0
    %v216 = vpop.f32.mrb[0].mxu0
    %v217 = vadd.f32 %v158, %v216
    %v218 = vpop.f32.mrb[0].mxu0
    %219 = vdwg.mxu0
    %220 = vrot.lane.b32.xlu0 %v150, 96
    %v221 = vpop.permute.xlu0 %220
    %v223 = vsel %vm161, %v152, 0
    %v226 = vsel %vm161, %v154, 0
    %v229 = vsel %vm161, %v221, 0
    %231 = vmatprep.subr.bf16.mxu0 0
    %232 = vmatpush1.bf16.xpose.msra.mxu0 %v229
    %233 = vmatprep.subr.bf16.mxu0 0
    %234 = vmatpush1.bf16.xpose.msra.mxu0 0
    %235 = vmatprep.subr.bf16.mxu0 0
    %236 = vmatpush1.bf16.xpose.msra.mxu0 0
    %237 = vmatprep.subr.bf16.mxu0 0
    %238 = vmatpush1.bf16.xpose.msra.mxu0 0
    %239 = vmatprep.subr.bf16.mxu0 0
    %240 = vmatpush1.bf16.xpose.msra.mxu0 0
    %241 = vmatprep.subr.bf16.mxu0 0
    %242 = vmatpush1.bf16.xpose.msra.mxu0 0
    %243 = vmatprep.subr.bf16.mxu0 0
    %244 = vmatpush1.bf16.xpose.msra.mxu0 0
    %245 = vmatprep.subr.bf16.mxu0 0
    %246 = vmatpush1.bf16.xpose.msra.mxu0 0
    %247 = vmatprep.subr.bf16.mxu0 0
    %248 = vmatpush1.bf16.xpose.msra.mxu0 0
    %249 = vmatprep.subr.bf16.mxu0 0
    %250 = vmatpush1.bf16.xpose.msra.mxu0 0
    %251 = vmatprep.subr.bf16.mxu0 0
    %252 = vmatpush1.bf16.xpose.msra.mxu0 0
    %253 = vmatprep.subr.bf16.mxu0 0
    %254 = vmatpush1.bf16.xpose.msra.mxu0 0
    %255 = vmatprep.subr.bf16.mxu0 0
    %256 = vmatpush1.bf16.xpose.msra.mxu0 0
    %257 = vmatprep.subr.bf16.mxu0 0
    %258 = vmatpush1.bf16.xpose.msra.mxu0 0
    %259 = vmatprep.subr.bf16.mxu0 0
    %260 = vmatpush1.bf16.xpose.msra.mxu0 0
    %261 = vmatprep.subr.bf16.mxu0 0
    %262 = vmatpush1.bf16.xpose.msra.mxu0 0
    %263 = vmatprep.mubr.bf16.mxu0 0
    %264 = vmatmul.mubr.bf16.gmra.mrb[0].mxu0 %v223
    %v265 = vpop.f32.mrb[0].mxu0
    %v266 = vadd.f32 %v155, %v265
    %v267 = vpop.f32.mrb[0].mxu0
    %v268 = vpop.f32.mrb[0].mxu0
    %v269 = vadd.f32 %v156, %v268
    %v270 = vpop.f32.mrb[0].mxu0
    %271 = vmatprep.mubr.bf16.mxu0 0
    %272 = vmatmul.mubr.bf16.gmra.mrb[0].mxu0 %v226
    %v273 = vpop.f32.mrb[0].mxu0
    %v274 = vadd.f32 %v157, %v273
    %v275 = vpop.f32.mrb[0].mxu0
    %v276 = vpop.f32.mrb[0].mxu0
    %v277 = vadd.f32 %v158, %v276
    %v278 = vpop.f32.mrb[0].mxu0
    %279 = vdwg.mxu0
    %vm280 = vcmask 130048
    %v281 = vsel %vm280, %v206, -inf
    %282 = vmax.xlane.f32.xlu0 %v281
    %v283 = vpop.xlane.xlu0 %282
    %v284 = vsel %vm280, %v209, -inf
    %285 = vmax.xlane.f32.xlu0 %v284
    %v286 = vpop.xlane.xlu0 %285
    %v287 = vsel %vm280, %v214, -inf
    %288 = vmax.xlane.f32.xlu0 %v287
    %v289 = vpop.xlane.xlu0 %288
    %v290 = vsel %vm280, %v217, -inf
    %291 = vmax.xlane.f32.xlu0 %v290
    %v292 = vpop.xlane.xlu0 %291
    %v293 = vsel %vm280, %v266, -inf
    %294 = vmax.xlane.f32.xlu0 %v293
    %v295 = vpop.xlane.xlu0 %294
    %v296 = vsel %vm280, %v269, -inf
    %297 = vmax.xlane.f32.xlu0 %v296
    %v298 = vpop.xlane.xlu0 %297
    %v299 = vsel %vm280, %v274, -inf
    %300 = vmax.xlane.f32.xlu0 %v299
    %v301 = vpop.xlane.xlu0 %300
    %v302 = vsel %vm280, %v277, -inf
    %303 = vmax.xlane.f32.xlu0 %v302
    %v304 = vpop.xlane.xlu0 %303
    %v305 = vsub.f32 %v206, %v283
    %v306 = vsub.f32 %v209, %v286
    %v307 = vsub.f32 %v214, %v289
    %v308 = vsub.f32 %v217, %v292
    %v309 = vsub.f32 %v266, %v295
    %v310 = vsub.f32 %v269, %v298
    %v311 = vsub.f32 %v274, %v301
    %v312 = vsub.f32 %v277, %v304
    %v313 = vmul.f32 %v305, 1.442695
    %v314 = vpow.pop %v313
    %v315 = vmul.f32 %v306, 1.442695
    %v316 = vpow.pop %v315
    %v317 = vmul.f32 %v307, 1.442695
    %v318 = vpow.pop %v317
    %v319 = vmul.f32 %v308, 1.442695
    %v320 = vpow.pop %v319
    %v321 = vmul.f32 %v309, 1.442695
    %v322 = vpow.pop %v321
    %v323 = vmul.f32 %v310, 1.442695
    %v324 = vpow.pop %v323
    %v325 = vmul.f32 %v311, 1.442695
    %v326 = vpow.pop %v325
    %v327 = vmul.f32 %v312, 1.442695
    %v328 = vpow.pop %v327
    %v329 = vsel %vm280, %v314, 0.0
    %330 = vadd.xlane.f32.xlu0 %v329
    %v331 = vpop.xlane.xlu0 %330
    %v332 = vsel %vm280, %v316, 0.0
    %333 = vadd.xlane.f32.xlu0 %v332
    %v334 = vpop.xlane.xlu0 %333
    %v335 = vsel %vm280, %v318, 0.0
    %336 = vadd.xlane.f32.xlu0 %v335
    %v337 = vpop.xlane.xlu0 %336
    %v338 = vsel %vm280, %v320, 0.0
    %339 = vadd.xlane.f32.xlu0 %v338
    %v340 = vpop.xlane.xlu0 %339
    %v341 = vsel %vm280, %v322, 0.0
    %342 = vadd.xlane.f32.xlu0 %v341
    %v343 = vpop.xlane.xlu0 %342
    %v344 = vsel %vm280, %v324, 0.0
    %345 = vadd.xlane.f32.xlu0 %v344
    %v346 = vpop.xlane.xlu0 %345
    %v347 = vsel %vm280, %v326, 0.0
    %348 = vadd.xlane.f32.xlu0 %v347
    %v349 = vpop.xlane.xlu0 %348
    %v350 = vsel %vm280, %v328, 0.0
    %351 = vadd.xlane.f32.xlu0 %v350
    %v352 = vpop.xlane.xlu0 %351
    %v353 = vrcp.pop %v331
    %v354 = vrcp.pop %v334
    %v355 = vrcp.pop %v337
    %v356 = vrcp.pop %v340
    %v357 = vrcp.pop %v343
    %v358 = vrcp.pop %v346
    %v359 = vrcp.pop %v349
    %v360 = vrcp.pop %v352
    %v361 = vmul.f32 %v314, %v353
    %v362 = vmul.f32 %v316, %v354
    %v363 = vmul.f32 %v318, %v355
    %v364 = vmul.f32 %v320, %v356
    %v365 = vmul.f32 %v322, %v357
    %v366 = vmul.f32 %v324, %v358
    %v367 = vmul.f32 %v326, %v359
    %v368 = vmul.f32 %v328, %v360
    %v369 = vpack.c.bf16 %v362, %v361
    %v370 = vpack.c.bf16 %v364, %v363
    %v371 = vpack.c.bf16 %v366, %v365
    %v372 = vpack.c.bf16 %v368, %v367
    %373 = vrot.lane.b32.xlu0 %v147, 80
    %v374 = vpop.permute.xlu0 %373
    %v377 = vsel %vm280, %v369, 0
    %v380 = vsel %vm280, %v370, 0
    %382 = vmatprep.subr.bf16.mxu0 0
    %383 = vmatpush1.bf16.msra.mxu0 %v374
    %384 = vmatprep.subr.bf16.mxu0 0
    %385 = vmatpush1.bf16.msra.mxu0 0
    %386 = vmatprep.subr.bf16.mxu0 0
    %387 = vmatpush1.bf16.msra.mxu0 0
    %388 = vmatprep.subr.bf16.mxu0 0
    %389 = vmatpush1.bf16.msra.mxu0 0
    %390 = vmatprep.subr.bf16.mxu0 0
    %391 = vmatpush1.bf16.msra.mxu0 0
    %392 = vmatprep.subr.bf16.mxu0 0
    %393 = vmatpush1.bf16.msra.mxu0 0
    %394 = vmatprep.subr.bf16.mxu0 0
    %395 = vmatpush1.bf16.msra.mxu0 0
    %396 = vmatprep.subr.bf16.mxu0 0
    %397 = vmatpush1.bf16.msra.mxu0 0
    %398 = vmatprep.subr.bf16.mxu0 0
    %399 = vmatpush1.bf16.msra.mxu0 0
    %400 = vmatprep.subr.bf16.mxu0 0
    %401 = vmatpush1.bf16.msra.mxu0 0
    %402 = vmatprep.subr.bf16.mxu0 0
    %403 = vmatpush1.bf16.msra.mxu0 0
    %404 = vmatprep.subr.bf16.mxu0 0
    %405 = vmatpush1.bf16.msra.mxu0 0
    %406 = vmatprep.subr.bf16.mxu0 0
    %407 = vmatpush1.bf16.msra.mxu0 0
    %408 = vmatprep.subr.bf16.mxu0 0
    %409 = vmatpush1.bf16.msra.mxu0 0
    %410 = vmatprep.subr.bf16.mxu0 0
    %411 = vmatpush1.bf16.msra.mxu0 0
    %412 = vmatprep.subr.bf16.mxu0 0
    %413 = vmatpush1.bf16.msra.mxu0 0
    %414 = vmatprep.mubr.bf16.mxu0 0
    %415 = vmatmul.mubr.bf16.gmra.mrb[0].mxu0 %v377
    %v416 = vpop.f32.mrb[0].mxu0
    %v417 = vadd.f32 0.0, %v416
    %v418 = vpop.f32.mrb[0].mxu0
    %v419 = vpop.f32.mrb[0].mxu0
    %v420 = vadd.f32 0.0, %v419
    %v421 = vpop.f32.mrb[0].mxu0
    %422 = vmatprep.mubr.bf16.mxu0 0
    %423 = vmatmul.mubr.bf16.gmra.mrb[0].mxu0 %v380
    %v424 = vpop.f32.mrb[0].mxu0
    %v425 = vadd.f32 0.0, %v424
    %v426 = vpop.f32.mrb[0].mxu0
    %v427 = vpop.f32.mrb[0].mxu0
    %v428 = vadd.f32 0.0, %v427
    %v429 = vpop.f32.mrb[0].mxu0
    %430 = vdwg.mxu0
    %431 = vrot.lane.b32.xlu0 %v150, 80
    %v432 = vpop.permute.xlu0 %431
    %v435 = vsel %vm280, %v371, 0
    %v438 = vsel %vm280, %v372, 0
    %440 = vmatprep.subr.bf16.mxu0 0
    %441 = vmatpush1.bf16.msra.mxu0 %v432
    %442 = vmatprep.subr.bf16.mxu0 0
    %443 = vmatpush1.bf16.msra.mxu0 0
    %444 = vmatprep.subr.bf16.mxu0 0
    %445 = vmatpush1.bf16.msra.mxu0 0
    %446 = vmatprep.subr.bf16.mxu0 0
    %447 = vmatpush1.bf16.msra.mxu0 0
    %448 = vmatprep.subr.bf16.mxu0 0
    %449 = vmatpush1.bf16.msra.mxu0 0
    %450 = vmatprep.subr.bf16.mxu0 0
    %451 = vmatpush1.bf16.msra.mxu0 0
    %452 = vmatprep.subr.bf16.mxu0 0
    %453 = vmatpush1.bf16.msra.mxu0 0
    %454 = vmatprep.subr.bf16.mxu0 0
    %455 = vmatpush1.bf16.msra.mxu0 0
    %456 = vmatprep.subr.bf16.mxu0 0
    %457 = vmatpush1.bf16.msra.mxu0 0
    %458 = vmatprep.subr.bf16.mxu0 0
    %459 = vmatpush1.bf16.msra.mxu0 0
    %460 = vmatprep.subr.bf16.mxu0 0
    %461 = vmatpush1.bf16.msra.mxu0 0
    %462 = vmatprep.subr.bf16.mxu0 0
    %463 = vmatpush1.bf16.msra.mxu0 0
    %464 = vmatprep.subr.bf16.mxu0 0
    %465 = vmatpush1.bf16.msra.mxu0 0
    %466 = vmatprep.subr.bf16.mxu0 0
    %467 = vmatpush1.bf16.msra.mxu0 0
    %468 = vmatprep.subr.bf16.mxu0 0
    %469 = vmatpush1.bf16.msra.mxu0 0
    %470 = vmatprep.subr.bf16.mxu0 0
    %471 = vmatpush1.bf16.msra.mxu0 0
    %472 = vmatprep.mubr.bf16.mxu0 0
    %473 = vmatmul.mubr.bf16.gmra.mrb[0].mxu0 %v435
    %v474 = vpop.f32.mrb[0].mxu0
    %v475 = vadd.f32 0.0, %v474
    %v476 = vpop.f32.mrb[0].mxu0
    %v477 = vpop.f32.mrb[0].mxu0
    %v478 = vadd.f32 0.0, %v477
    %v479 = vpop.f32.mrb[0].mxu0
    %480 = vmatprep.mubr.bf16.mxu0 0
    %481 = vmatmul.mubr.bf16.gmra.mrb[0].mxu0 %v438
    %v482 = vpop.f32.mrb[0].mxu0
    %v483 = vadd.f32 0.0, %v482
    %v484 = vpop.f32.mrb[0].mxu0
    %v485 = vpop.f32.mrb[0].mxu0
    %v486 = vadd.f32 0.0, %v485
    %v487 = vpop.f32.mrb[0].mxu0
    %488 = vdwg.mxu0
    %v489 = vpack.c.bf16 %v420, %v417
    %v490 = vpack.c.bf16 %v428, %v425
    %v491 = vpack.c.bf16 %v478, %v475
    %v492 = vpack.c.bf16 %v486, %v483
    %v493 = vld [vmem:[%s2] sm:$0xf]
    %v494 = vld [vmem:[%s2 + $0x4] sm:$0xf]
    %v495 = vld [vmem:[%s2 + $0x8] sm:$0xf]
    %v496 = vld [vmem:[%s2 + $0xc] sm:$0xf]
    %v498 = vsel %vm161, %v489, 0
    %vm500 = vcmask 1043456
    %v502 = vsel %vm500, %v493, 0
    %504 = vmatprep.subr.bf16.mxu0 0
    %505 = vmatpush1.bf16.msra.mxu0 %v502
    %506 = vmatprep.subr.bf16.mxu0 0
    %507 = vmatpush1.bf16.msra.mxu0 0
    %508 = vmatprep.subr.bf16.mxu0 0
    %509 = vmatpush1.bf16.msra.mxu0 0
    %510 = vmatprep.subr.bf16.mxu0 0
    %511 = vmatpush1.bf16.msra.mxu0 0
    %512 = vmatprep.subr.bf16.mxu0 0
    %513 = vmatpush1.bf16.msra.mxu0 0
    %514 = vmatprep.subr.bf16.mxu0 0
    %515 = vmatpush1.bf16.msra.mxu0 0
    %516 = vmatprep.subr.bf16.mxu0 0
    %517 = vmatpush1.bf16.msra.mxu0 0
    %518 = vmatprep.subr.bf16.mxu0 0
    %519 = vmatpush1.bf16.msra.mxu0 0
    %520 = vmatprep.subr.bf16.mxu0 0
    %521 = vmatpush1.bf16.msra.mxu0 0
    %522 = vmatprep.subr.bf16.mxu0 0
    %523 = vmatpush1.bf16.msra.mxu0 0
    %524 = vmatprep.subr.bf16.mxu0 0
    %525 = vmatpush1.bf16.msra.mxu0 0
    %526 = vmatprep.subr.bf16.mxu0 0
    %527 = vmatpush1.bf16.msra.mxu0 0
    %528 = vmatprep.subr.bf16.mxu0 0
    %529 = vmatpush1.bf16.msra.mxu0 0
    %530 = vmatprep.subr.bf16.mxu0 0
    %531 = vmatpush1.bf16.msra.mxu0 0
    %532 = vmatprep.subr.bf16.mxu0 0
    %533 = vmatpush1.bf16.msra.mxu0 0
    %534 = vmatprep.subr.bf16.mxu0 0
    %535 = vmatpush1.bf16.msra.mxu0 0
    %536 = vmatprep.mubr.bf16.mxu0 0
    %537 = vmatmul.mubr.bf16.gmra.mrb[0].mxu0 %v498
    %v538 = vpop.f32.mrb[0].mxu0
    %v539 = vadd.f32 0.0, %v538
    %v540 = vpop.f32.mrb[0].mxu0
    %v541 = vpop.f32.mrb[0].mxu0
    %v542 = vadd.f32 0.0, %v541
    %v543 = vpop.f32.mrb[0].mxu0
    %544 = vdwg.mxu0
    %v546 = vsel %vm161, %v490, 0
    %v549 = vsel %vm500, %v494, 0
    %551 = vmatprep.subr.bf16.mxu0 0
    %552 = vmatpush1.bf16.msra.mxu0 %v549
    %553 = vmatprep.subr.bf16.mxu0 0
    %554 = vmatpush1.bf16.msra.mxu0 0
    %555 = vmatprep.subr.bf16.mxu0 0
    %556 = vmatpush1.bf16.msra.mxu0 0
    %557 = vmatprep.subr.bf16.mxu0 0
    %558 = vmatpush1.bf16.msra.mxu0 0
    %559 = vmatprep.subr.bf16.mxu0 0
    %560 = vmatpush1.bf16.msra.mxu0 0
    %561 = vmatprep.subr.bf16.mxu0 0
    %562 = vmatpush1.bf16.msra.mxu0 0
    %563 = vmatprep.subr.bf16.mxu0 0
    %564 = vmatpush1.bf16.msra.mxu0 0
    %565 = vmatprep.subr.bf16.mxu0 0
    %566 = vmatpush1.bf16.msra.mxu0 0
    %567 = vmatprep.subr.bf16.mxu0 0
    %568 = vmatpush1.bf16.msra.mxu0 0
    %569 = vmatprep.subr.bf16.mxu0 0
    %570 = vmatpush1.bf16.msra.mxu0 0
    %571 = vmatprep.subr.bf16.mxu0 0
    %572 = vmatpush1.bf16.msra.mxu0 0
    %573 = vmatprep.subr.bf16.mxu0 0
    %574 = vmatpush1.bf16.msra.mxu0 0
    %575 = vmatprep.subr.bf16.mxu0 0
    %576 = vmatpush1.bf16.msra.mxu0 0
    %577 = vmatprep.subr.bf16.mxu0 0
    %578 = vmatpush1.bf16.msra.mxu0 0
    %579 = vmatprep.subr.bf16.mxu0 0
    %580 = vmatpush1.bf16.msra.mxu0 0
    %581 = vmatprep.subr.bf16.mxu0 0
    %582 = vmatpush1.bf16.msra.mxu0 0
    %583 = vmatprep.mubr.bf16.mxu0 0
    %584 = vmatmul.mubr.bf16.gmra.mrb[0].mxu0 %v546
    %v585 = vpop.f32.mrb[0].mxu0
    %v586 = vadd.f32 0.0, %v585
    %v587 = vpop.f32.mrb[0].mxu0
    %v588 = vpop.f32.mrb[0].mxu0
    %v589 = vadd.f32 0.0, %v588
    %v590 = vpop.f32.mrb[0].mxu0
    %591 = vdwg.mxu0
    %v593 = vsel %vm161, %v491, 0
    %v596 = vsel %vm500, %v495, 0
    %598 = vmatprep.subr.bf16.mxu0 0
    %599 = vmatpush1.bf16.msra.mxu0 %v596
    %600 = vmatprep.subr.bf16.mxu0 0
    %601 = vmatpush1.bf16.msra.mxu0 0
    %602 = vmatprep.subr.bf16.mxu0 0
    %603 = vmatpush1.bf16.msra.mxu0 0
    %604 = vmatprep.subr.bf16.mxu0 0
    %605 = vmatpush1.bf16.msra.mxu0 0
    %606 = vmatprep.subr.bf16.mxu0 0
    %607 = vmatpush1.bf16.msra.mxu0 0
    %608 = vmatprep.subr.bf16.mxu0 0
    %609 = vmatpush1.bf16.msra.mxu0 0
    %610 = vmatprep.subr.bf16.mxu0 0
    %611 = vmatpush1.bf16.msra.mxu0 0
    %612 = vmatprep.subr.bf16.mxu0 0
    %613 = vmatpush1.bf16.msra.mxu0 0
    %614 = vmatprep.subr.bf16.mxu0 0
    %615 = vmatpush1.bf16.msra.mxu0 0
    %616 = vmatprep.subr.bf16.mxu0 0
    %617 = vmatpush1.bf16.msra.mxu0 0
    %618 = vmatprep.subr.bf16.mxu0 0
    %619 = vmatpush1.bf16.msra.mxu0 0
    %620 = vmatprep.subr.bf16.mxu0 0
    %621 = vmatpush1.bf16.msra.mxu0 0
    %622 = vmatprep.subr.bf16.mxu0 0
    %623 = vmatpush1.bf16.msra.mxu0 0
    %624 = vmatprep.subr.bf16.mxu0 0
    %625 = vmatpush1.bf16.msra.mxu0 0
    %626 = vmatprep.subr.bf16.mxu0 0
    %627 = vmatpush1.bf16.msra.mxu0 0
    %628 = vmatprep.subr.bf16.mxu0 0
    %629 = vmatpush1.bf16.msra.mxu0 0
    %630 = vmatprep.mubr.bf16.mxu0 0
    %631 = vmatmul.mubr.bf16.gmra.mrb[0].mxu0 %v593
    %v632 = vpop.f32.mrb[0].mxu0
    %v633 = vadd.f32 0.0, %v632
    %v634 = vpop.f32.mrb[0].mxu0
    %v635 = vpop.f32.mrb[0].mxu0
    %v636 = vadd.f32 0.0, %v635
    %v637 = vpop.f32.mrb[0].mxu0
    %638 = vdwg.mxu0
    %v640 = vsel %vm161, %v492, 0
    %v643 = vsel %vm500, %v496, 0
    %645 = vmatprep.subr.bf16.mxu0 0
    %646 = vmatpush1.bf16.msra.mxu0 %v643
    %647 = vmatprep.subr.bf16.mxu0 0
    %648 = vmatpush1.bf16.msra.mxu0 0
    %649 = vmatprep.subr.bf16.mxu0 0
    %650 = vmatpush1.bf16.msra.mxu0 0
    %651 = vmatprep.subr.bf16.mxu0 0
    %652 = vmatpush1.bf16.msra.mxu0 0
    %653 = vmatprep.subr.bf16.mxu0 0
    %654 = vmatpush1.bf16.msra.mxu0 0
    %655 = vmatprep.subr.bf16.mxu0 0
    %656 = vmatpush1.bf16.msra.mxu0 0
    %657 = vmatprep.subr.bf16.mxu0 0
    %658 = vmatpush1.bf16.msra.mxu0 0
    %659 = vmatprep.subr.bf16.mxu0 0
    %660 = vmatpush1.bf16.msra.mxu0 0
    %661 = vmatprep.subr.bf16.mxu0 0
    %662 = vmatpush1.bf16.msra.mxu0 0
    %663 = vmatprep.subr.bf16.mxu0 0
    %664 = vmatpush1.bf16.msra.mxu0 0
    %665 = vmatprep.subr.bf16.mxu0 0
    %666 = vmatpush1.bf16.msra.mxu0 0
    %667 = vmatprep.subr.bf16.mxu0 0
    %668 = vmatpush1.bf16.msra.mxu0 0
    %669 = vmatprep.subr.bf16.mxu0 0
    %670 = vmatpush1.bf16.msra.mxu0 0
    %671 = vmatprep.subr.bf16.mxu0 0
    %672 = vmatpush1.bf16.msra.mxu0 0
    %673 = vmatprep.subr.bf16.mxu0 0
    %674 = vmatpush1.bf16.msra.mxu0 0
    %675 = vmatprep.subr.bf16.mxu0 0
    %676 = vmatpush1.bf16.msra.mxu0 0
    %677 = vmatprep.mubr.bf16.mxu0 0
    %678 = vmatmul.mubr.bf16.gmra.mrb[0].mxu0 %v640
    %v679 = vpop.f32.mrb[0].mxu0
    %v680 = vadd.f32 0.0, %v679
    %v681 = vpop.f32.mrb[0].mxu0
    %v682 = vpop.f32.mrb[0].mxu0
    %v683 = vadd.f32 0.0, %v682
    %v684 = vpop.f32.mrb[0].mxu0
    %685 = vdwg.mxu0
    %v686 = vsel %vm76, %v539, 0.0
    %v687 = vsel %vm76, %v586, 0.0
    %v688 = vadd.f32 %v686, %v687
    %v689 = vsel %vm76, %v633, 0.0
    %v690 = vadd.f32 %v688, %v689
    %v691 = vsel %vm76, %v680, 0.0
    %v692 = vadd.f32 %v690, %v691
    %v693 = vsel %vm76, %v542, 0.0
    %v694 = vsel %vm76, %v589, 0.0
    %v695 = vadd.f32 %v693, %v694
    %v696 = vsel %vm76, %v636, 0.0
    %v697 = vadd.f32 %v695, %v696
    %v698 = vsel %vm76, %v683, 0.0
    %v699 = vadd.f32 %v697, %v698
    %700 = vst.msk [vmem:[#allocation7] sm:$0xff] %vm76, %v692
    %701 = vst.msk [vmem:[#allocation7 + $0x8] sm:$0xff] %vm76, %v699
    // Predicated region
    $region34: #{tpu_custom_call.1} parent=1 // pred_check
      _
    $region35: #{tpu_custom_call.1} parent=1 // pred_check_branch
      %703 = sbr.rel (0) target = $region37
    $region36: #{tpu_custom_call.1} parent=1 // pred_region
      %s705 = ssub.s32 256, 256
      %706 = vsyncadd [#allocation4], %s705
      %s707 = sshll.u32 [#allocation7], 4
      %s708 = int_to_ptr.vmem [resolvable:$true] %s707
      %713 = dma.vmem_to_hbm [thread:$0]  %s708, 256, %s6, [#allocation4], 128, 128, 8
    $region37: #{tpu_custom_call.1} parent=1 // pred_fallthru
      _
    // Predicated region
    $region38: #{tpu_custom_call.1} parent=1 // pred_check
      _
    $region39: #{tpu_custom_call.1} parent=1 // pred_check_branch
      %715 = sbr.rel (0) target = $region41
    $region40: #{tpu_custom_call.1} parent=1 // pred_region
      %716 = dma.done [#allocation4], 256
    $region41: #{tpu_custom_call.1} parent=1 // pred_fallthru
      _
    %717 = vsyncpa [#allocation3], 1
    %718 = vsyncpa [#allocation6], 1
    %719 = vsyncpa [#allocation4], 1

</llo_original>
